<compile_context>
chip_gen: v7x
topology: tpu7x:2x2x1
jax: 0.10.0
libtpu: 0.0.40
codegen_flags: <defaults>
</compile_context>

<pallas_src>
import functools

import jax
import jax.numpy as jnp
from jax import lax
from jax.experimental import pallas as pl
from jax.experimental.pallas import tpu as pltpu

KERNEL_SIZE = 7
PAD = KERNEL_SIZE // 2
ROW_STRIP = 8          # sublane-tile strip height for the tap accumulation
_UNROLL_STRIPS = 8     # Python-unroll the strip loop when H/8 <= this


def _xunits_kernel(w_ref, b_ref, x_ref, out_ref, xp_ref, *, H, W):
    """One (batch, channel) plane per grid step.

    w_ref:   SMEM (C, K*K) f32  per-channel depthwise taps (scalar prefetch)
    b_ref:   SMEM (C,)     f32  per-channel bias            (scalar prefetch)
    x_ref:   VMEM (1, 1, H, W)  input plane
    out_ref: VMEM (1, 1, H, W)  gated output plane
    xp_ref:  VMEM (H+2P, W+2P) f32 scratch: zero-padded plane
    """
    K = KERNEL_SIZE
    c = pl.program_id(1)
    Hp, Wp = H + 2 * PAD, W + 2 * PAD

    # Build the zero-padded plane: zero only the halo borders; the interior is
    # fully overwritten every step, so the "parallel" grid stays correct
    # regardless of which core / order the steps run in.
    xp_ref[0:PAD, :] = jnp.zeros((PAD, Wp), jnp.float32)
    xp_ref[PAD + H:Hp, :] = jnp.zeros((PAD, Wp), jnp.float32)
    xp_ref[:, 0:PAD] = jnp.zeros((Hp, PAD), jnp.float32)
    xp_ref[:, PAD + W:Wp] = jnp.zeros((Hp, PAD), jnp.float32)
    xp_ref[PAD:PAD + H, PAD:PAD + W] = x_ref[0, 0].astype(jnp.float32)

    # Hoist this channel's 49 taps + bias out of the strip loop (cheap SMEM
    # scalar reads; the splat at each multiply is the only per-tap extra).
    w = [w_ref[c, t] for t in range(K * K)]
    b_c = b_ref[c]

    def conv_gate_strip(r0, hs):
        # Depthwise 7x7 conv + sigmoid gate + x*gate for rows [r0, r0+hs).
        acc = jnp.full((hs, W), b_c, dtype=jnp.float32)          # bias folded in
        for i in range(K):
            for j in range(K):
                tap = xp_ref[pl.ds(r0 + i, hs), pl.ds(j, W)]      # (hs, W)
                acc = acc + w[i * K + j] * tap                    # VPU FMA
        # sigmoid = 1 / (1 + exp(-t)); exp rides the EUP slot.
        gate = pl.reciprocal(1.0 + jnp.exp(-acc), approx=False)
        x_strip = x_ref[0, 0, pl.ds(r0, hs), :].astype(jnp.float32)
        out_ref[0, 0, pl.ds(r0, hs), :] = (x_strip * gate).astype(out_ref.dtype)

    n_full = H // ROW_STRIP
    rem = H % ROW_STRIP

    if 0 < n_full <= _UNROLL_STRIPS:
        # Short, fixed trip count: unroll for LLO scheduler visibility.
        for s in range(n_full):
            conv_gate_strip(s * ROW_STRIP, ROW_STRIP)
    elif n_full > 0:
        def body(s, carry):
            conv_gate_strip(pl.multiple_of(s * ROW_STRIP, ROW_STRIP), ROW_STRIP)
            return carry
        lax.fori_loop(0, n_full, body, 0)
    if rem > 0:
        conv_gate_strip(n_full * ROW_STRIP, rem)


def _derive_vmem_limit(per_step_bytes):
    """Derive the VMEM cap from the real per-step footprint + chip info."""
    try:
        cap = int(pltpu.get_tpu_info().vmem_capacity_bytes)
    except Exception:
        cap = 64 * 1024 * 1024          # conservative: v7x physical VMEM
    want = max(2 * per_step_bytes, 16 * 1024 * 1024)
    return int(min(want, int(cap * 0.9)))


def xunits_forward(x, weight, bias):
    """x: (N, C, H, W); weight: (C, 1, K, K); bias: (C,). Returns (N, C, H, W)."""
    N, C, H, W = x.shape
    K = KERNEL_SIZE
    assert weight.shape == (C, 1, K, K) and bias.shape == (C,)

    # Per-channel scalar tables (SMEM via scalar prefetch).
    w_tab = weight.reshape(C, K * K).astype(jnp.float32)
    b_tab = bias.reshape(C).astype(jnp.float32)

    Hp, Wp = H + 2 * PAD, W + 2 * PAD
    bpe = jnp.dtype(x.dtype).itemsize
    lane = lambda n: -(-n // 128) * 128
    sub = lambda n: -(-n // 8) * 8
    plane_bytes = sub(H) * lane(W) * bpe
    per_step_bytes = 4 * plane_bytes + sub(Hp) * lane(Wp) * 4   # 2x in + 2x out + scratch

    kernel = functools.partial(_xunits_kernel, H=H, W=W)

    out = pl.pallas_call(
        kernel,
        out_shape=jax.ShapeDtypeStruct((N, C, H, W), x.dtype),
        grid_spec=pltpu.PrefetchScalarGridSpec(
            num_scalar_prefetch=2,
            grid=(N, C),
            in_specs=[
                pl.BlockSpec((1, 1, H, W), lambda n, c, w, b: (n, c, 0, 0)),
            ],
            out_specs=pl.BlockSpec((1, 1, H, W), lambda n, c, w, b: (n, c, 0, 0)),
            scratch_shapes=[pltpu.VMEM((Hp, Wp), jnp.float32)],
        ),
        compiler_params=pltpu.CompilerParams(
            dimension_semantics=("parallel", "parallel"),
            vmem_limit_bytes=_derive_vmem_limit(per_step_bytes),
        ),
    )(w_tab, b_tab, x)
    return out


def xunits_reference(x, weight, bias):
    """Pure-JAX reference: depthwise conv + sigmoid gate (NCHW)."""
    C = x.shape[1]
    conv = lax.conv_general_dilated(
        x.astype(jnp.float32),
        weight.astype(jnp.float32),            # (C, 1, K, K) with groups=C
        window_strides=(1, 1),
        padding=((PAD, PAD), (PAD, PAD)),
        dimension_numbers=("NCHW", "OIHW", "NCHW"),
        feature_group_count=C,
    ) + bias.reshape(1, C, 1, 1).astype(jnp.float32)
    return x.astype(jnp.float32) * jax.nn.sigmoid(conv)


if __name__ == "__main__":
    # Small, module-consistent shapes: batch=2, channels=4, spatial=16x16.
    N, C, H, W = 2, 4, 16, 16

    key = jax.random.PRNGKey(0)
    kx, kw, kb = jax.random.split(key, 3)
    x = jax.random.normal(kx, (N, C, H, W), dtype=jnp.float32)
    # Deterministic synthetic params (shapes from nn.Conv2d(C, C, 7, groups=C)).
    weight = 0.1 * jax.random.normal(kw, (C, 1, KERNEL_SIZE, KERNEL_SIZE), dtype=jnp.float32)
    bias = 0.1 * jax.random.normal(kb, (C,), dtype=jnp.float32)

    out = jax.block_until_ready(xunits_forward(x, weight, bias))
    ref = xunits_reference(x, weight, bias)
    assert jnp.allclose(out, ref, atol=1e-5, rtol=1e-5), "mismatch vs reference"

    print("KERNEL_OK")
</pallas_src>

<mosaic_0001>
module attributes {stable_mosaic.version = 11 : i64} {
  func.func @_xunits_kernel(%arg0: i32, %arg1: i32, %arg2: memref<4x49xf32, #tpu.memory_space<smem>>, %arg3: memref<4xf32, #tpu.memory_space<smem>>, %arg4: memref<1x1x16x16xf32, #tpu.memory_space<vmem>>, %arg5: memref<1x1x16x16xf32, #tpu.memory_space<vmem>>, %arg6: memref<22x22xf32, #tpu.memory_space<vmem>>) attributes {dimension_semantics = [#tpu.dimension_semantics<parallel>, #tpu.dimension_semantics<parallel>], iteration_bounds = array<i64: 2, 4>, scalar_prefetch = 2 : i64, scratch_operands = 1 : i64, tpu.core_type = #tpu.core_type<tc>, window_params = [{transform_indices = @transform_0, window_bounds = array<i64: 1, 1, 16, 16>}, {transform_indices = @transform_1, window_bounds = array<i64: 1, 1, 16, 16>}]} {
    %cst = arith.constant 0.000000e+00 : f32
    %0 = vector.broadcast %cst : f32 to vector<3x22xf32>
    %c0 = arith.constant 0 : index
    %c0_0 = arith.constant 0 : index
    %1 = vector.load %arg6[%c0, %c0_0] : memref<22x22xf32, #tpu.memory_space<vmem>>, vector<3x22xf32>
    tpu.vector_store %arg6[%c0, %c0_0], %0 {strides = array<i32>} : memref<22x22xf32, #tpu.memory_space<vmem>>, vector<3x22xf32>,
    %cst_1 = arith.constant 0.000000e+00 : f32
    %2 = vector.broadcast %cst_1 : f32 to vector<3x22xf32>
    %c19 = arith.constant 19 : index
    %c0_2 = arith.constant 0 : index
    %3 = vector.load %arg6[%c19, %c0_2] : memref<22x22xf32, #tpu.memory_space<vmem>>, vector<3x22xf32>
    tpu.vector_store %arg6[%c19, %c0_2], %2 {strides = array<i32>} : memref<22x22xf32, #tpu.memory_space<vmem>>, vector<3x22xf32>,
    %cst_3 = arith.constant 0.000000e+00 : f32
    %4 = vector.broadcast %cst_3 : f32 to vector<22x3xf32>
    %c0_4 = arith.constant 0 : index
    %c0_5 = arith.constant 0 : index
    %5 = vector.load %arg6[%c0_4, %c0_5] : memref<22x22xf32, #tpu.memory_space<vmem>>, vector<22x3xf32>
    tpu.vector_store %arg6[%c0_4, %c0_5], %4 {strides = array<i32>} : memref<22x22xf32, #tpu.memory_space<vmem>>, vector<22x3xf32>,
    %cst_6 = arith.constant 0.000000e+00 : f32
    %6 = vector.broadcast %cst_6 : f32 to vector<22x3xf32>
    %c0_7 = arith.constant 0 : index
    %c19_8 = arith.constant 19 : index
    %7 = vector.load %arg6[%c0_7, %c19_8] : memref<22x22xf32, #tpu.memory_space<vmem>>, vector<22x3xf32>
    tpu.vector_store %arg6[%c0_7, %c19_8], %6 {strides = array<i32>} : memref<22x22xf32, #tpu.memory_space<vmem>>, vector<22x3xf32>,
    %c0_9 = arith.constant 0 : index
    %c0_10 = arith.constant 0 : index
    %c0_11 = arith.constant 0 : index
    %c0_12 = arith.constant 0 : index
    %8 = vector.load %arg4[%c0_9, %c0_10, %c0_11, %c0_12] : memref<1x1x16x16xf32, #tpu.memory_space<vmem>>, vector<1x1x16x16xf32>
    %9 = vector.shape_cast %8 : vector<1x1x16x16xf32> to vector<16x16xf32>
    %c3 = arith.constant 3 : index
    %c3_13 = arith.constant 3 : index
    %10 = vector.load %arg6[%c3, %c3_13] : memref<22x22xf32, #tpu.memory_space<vmem>>, vector<16x16xf32>
    tpu.vector_store %arg6[%c3, %c3_13], %9 {strides = array<i32>} : memref<22x22xf32, #tpu.memory_space<vmem>>, vector<16x16xf32>,
    %11 = arith.index_cast %arg1 : i32 to index
    %c0_14 = arith.constant 0 : index
    %12 = memref.load %arg2[%11, %c0_14] : memref<4x49xf32, #tpu.memory_space<smem>>
    %13 = arith.index_cast %arg1 : i32 to index
    %c1 = arith.constant 1 : index
    %14 = memref.load %arg2[%13, %c1] : memref<4x49xf32, #tpu.memory_space<smem>>
    %15 = arith.index_cast %arg1 : i32 to index
    %c2 = arith.constant 2 : index
    %16 = memref.load %arg2[%15, %c2] : memref<4x49xf32, #tpu.memory_space<smem>>
    %17 = arith.index_cast %arg1 : i32 to index
    %c3_15 = arith.constant 3 : index
    %18 = memref.load %arg2[%17, %c3_15] : memref<4x49xf32, #tpu.memory_space<smem>>
    %19 = arith.index_cast %arg1 : i32 to index
    %c4 = arith.constant 4 : index
    %20 = memref.load %arg2[%19, %c4] : memref<4x49xf32, #tpu.memory_space<smem>>
    %21 = arith.index_cast %arg1 : i32 to index
    %c5 = arith.constant 5 : index
    %22 = memref.load %arg2[%21, %c5] : memref<4x49xf32, #tpu.memory_space<smem>>
    %23 = arith.index_cast %arg1 : i32 to index
    %c6 = arith.constant 6 : index
    %24 = memref.load %arg2[%23, %c6] : memref<4x49xf32, #tpu.memory_space<smem>>
    %25 = arith.index_cast %arg1 : i32 to index
    %c7 = arith.constant 7 : index
    %26 = memref.load %arg2[%25, %c7] : memref<4x49xf32, #tpu.memory_space<smem>>
    %27 = arith.index_cast %arg1 : i32 to index
    %c8 = arith.constant 8 : index
    %28 = memref.load %arg2[%27, %c8] : memref<4x49xf32, #tpu.memory_space<smem>>
    %29 = arith.index_cast %arg1 : i32 to index
    %c9 = arith.constant 9 : index
    %30 = memref.load %arg2[%29, %c9] : memref<4x49xf32, #tpu.memory_space<smem>>
    %31 = arith.index_cast %arg1 : i32 to index
    %c10 = arith.constant 10 : index
    %32 = memref.load %arg2[%31, %c10] : memref<4x49xf32, #tpu.memory_space<smem>>
    %33 = arith.index_cast %arg1 : i32 to index
    %c11 = arith.constant 11 : index
    %34 = memref.load %arg2[%33, %c11] : memref<4x49xf32, #tpu.memory_space<smem>>
    %35 = arith.index_cast %arg1 : i32 to index
    %c12 = arith.constant 12 : index
    %36 = memref.load %arg2[%35, %c12] : memref<4x49xf32, #tpu.memory_space<smem>>
    %37 = arith.index_cast %arg1 : i32 to index
    %c13 = arith.constant 13 : index
    %38 = memref.load %arg2[%37, %c13] : memref<4x49xf32, #tpu.memory_space<smem>>
    %39 = arith.index_cast %arg1 : i32 to index
    %c14 = arith.constant 14 : index
    %40 = memref.load %arg2[%39, %c14] : memref<4x49xf32, #tpu.memory_space<smem>>
    %41 = arith.index_cast %arg1 : i32 to index
    %c15 = arith.constant 15 : index
    %42 = memref.load %arg2[%41, %c15] : memref<4x49xf32, #tpu.memory_space<smem>>
    %43 = arith.index_cast %arg1 : i32 to index
    %c16 = arith.constant 16 : index
    %44 = memref.load %arg2[%43, %c16] : memref<4x49xf32, #tpu.memory_space<smem>>
    %45 = arith.index_cast %arg1 : i32 to index
    %c17 = arith.constant 17 : index
    %46 = memref.load %arg2[%45, %c17] : memref<4x49xf32, #tpu.memory_space<smem>>
    %47 = arith.index_cast %arg1 : i32 to index
    %c18 = arith.constant 18 : index
    %48 = memref.load %arg2[%47, %c18] : memref<4x49xf32, #tpu.memory_space<smem>>
    %49 = arith.index_cast %arg1 : i32 to index
    %c19_16 = arith.constant 19 : index
    %50 = memref.load %arg2[%49, %c19_16] : memref<4x49xf32, #tpu.memory_space<smem>>
    %51 = arith.index_cast %arg1 : i32 to index
    %c20 = arith.constant 20 : index
    %52 = memref.load %arg2[%51, %c20] : memref<4x49xf32, #tpu.memory_space<smem>>
    %53 = arith.index_cast %arg1 : i32 to index
    %c21 = arith.constant 21 : index
    %54 = memref.load %arg2[%53, %c21] : memref<4x49xf32, #tpu.memory_space<smem>>
    %55 = arith.index_cast %arg1 : i32 to index
    %c22 = arith.constant 22 : index
    %56 = memref.load %arg2[%55, %c22] : memref<4x49xf32, #tpu.memory_space<smem>>
    %57 = arith.index_cast %arg1 : i32 to index
    %c23 = arith.constant 23 : index
    %58 = memref.load %arg2[%57, %c23] : memref<4x49xf32, #tpu.memory_space<smem>>
    %59 = arith.index_cast %arg1 : i32 to index
    %c24 = arith.constant 24 : index
    %60 = memref.load %arg2[%59, %c24] : memref<4x49xf32, #tpu.memory_space<smem>>
    %61 = arith.index_cast %arg1 : i32 to index
    %c25 = arith.constant 25 : index
    %62 = memref.load %arg2[%61, %c25] : memref<4x49xf32, #tpu.memory_space<smem>>
    %63 = arith.index_cast %arg1 : i32 to index
    %c26 = arith.constant 26 : index
    %64 = memref.load %arg2[%63, %c26] : memref<4x49xf32, #tpu.memory_space<smem>>
    %65 = arith.index_cast %arg1 : i32 to index
    %c27 = arith.constant 27 : index
    %66 = memref.load %arg2[%65, %c27] : memref<4x49xf32, #tpu.memory_space<smem>>
    %67 = arith.index_cast %arg1 : i32 to index
    %c28 = arith.constant 28 : index
    %68 = memref.load %arg2[%67, %c28] : memref<4x49xf32, #tpu.memory_space<smem>>
    %69 = arith.index_cast %arg1 : i32 to index
    %c29 = arith.constant 29 : index
    %70 = memref.load %arg2[%69, %c29] : memref<4x49xf32, #tpu.memory_space<smem>>
    %71 = arith.index_cast %arg1 : i32 to index
    %c30 = arith.constant 30 : index
    %72 = memref.load %arg2[%71, %c30] : memref<4x49xf32, #tpu.memory_space<smem>>
    %73 = arith.index_cast %arg1 : i32 to index
    %c31 = arith.constant 31 : index
    %74 = memref.load %arg2[%73, %c31] : memref<4x49xf32, #tpu.memory_space<smem>>
    %75 = arith.index_cast %arg1 : i32 to index
    %c32 = arith.constant 32 : index
    %76 = memref.load %arg2[%75, %c32] : memref<4x49xf32, #tpu.memory_space<smem>>
    %77 = arith.index_cast %arg1 : i32 to index
    %c33 = arith.constant 33 : index
    %78 = memref.load %arg2[%77, %c33] : memref<4x49xf32, #tpu.memory_space<smem>>
    %79 = arith.index_cast %arg1 : i32 to index
    %c34 = arith.constant 34 : index
    %80 = memref.load %arg2[%79, %c34] : memref<4x49xf32, #tpu.memory_space<smem>>
    %81 = arith.index_cast %arg1 : i32 to index
    %c35 = arith.constant 35 : index
    %82 = memref.load %arg2[%81, %c35] : memref<4x49xf32, #tpu.memory_space<smem>>
    %83 = arith.index_cast %arg1 : i32 to index
    %c36 = arith.constant 36 : index
    %84 = memref.load %arg2[%83, %c36] : memref<4x49xf32, #tpu.memory_space<smem>>
    %85 = arith.index_cast %arg1 : i32 to index
    %c37 = arith.constant 37 : index
    %86 = memref.load %arg2[%85, %c37] : memref<4x49xf32, #tpu.memory_space<smem>>
    %87 = arith.index_cast %arg1 : i32 to index
    %c38 = arith.constant 38 : index
    %88 = memref.load %arg2[%87, %c38] : memref<4x49xf32, #tpu.memory_space<smem>>
    %89 = arith.index_cast %arg1 : i32 to index
    %c39 = arith.constant 39 : index
    %90 = memref.load %arg2[%89, %c39] : memref<4x49xf32, #tpu.memory_space<smem>>
    %91 = arith.index_cast %arg1 : i32 to index
    %c40 = arith.constant 40 : index
    %92 = memref.load %arg2[%91, %c40] : memref<4x49xf32, #tpu.memory_space<smem>>
    %93 = arith.index_cast %arg1 : i32 to index
    %c41 = arith.constant 41 : index
    %94 = memref.load %arg2[%93, %c41] : memref<4x49xf32, #tpu.memory_space<smem>>
    %95 = arith.index_cast %arg1 : i32 to index
    %c42 = arith.constant 42 : index
    %96 = memref.load %arg2[%95, %c42] : memref<4x49xf32, #tpu.memory_space<smem>>
    %97 = arith.index_cast %arg1 : i32 to index
    %c43 = arith.constant 43 : index
    %98 = memref.load %arg2[%97, %c43] : memref<4x49xf32, #tpu.memory_space<smem>>
    %99 = arith.index_cast %arg1 : i32 to index
    %c44 = arith.constant 44 : index
    %100 = memref.load %arg2[%99, %c44] : memref<4x49xf32, #tpu.memory_space<smem>>
    %101 = arith.index_cast %arg1 : i32 to index
    %c45 = arith.constant 45 : index
    %102 = memref.load %arg2[%101, %c45] : memref<4x49xf32, #tpu.memory_space<smem>>
    %103 = arith.index_cast %arg1 : i32 to index
    %c46 = arith.constant 46 : index
    %104 = memref.load %arg2[%103, %c46] : memref<4x49xf32, #tpu.memory_space<smem>>
    %105 = arith.index_cast %arg1 : i32 to index
    %c47 = arith.constant 47 : index
    %106 = memref.load %arg2[%105, %c47] : memref<4x49xf32, #tpu.memory_space<smem>>
    %107 = arith.index_cast %arg1 : i32 to index
    %c48 = arith.constant 48 : index
    %108 = memref.load %arg2[%107, %c48] : memref<4x49xf32, #tpu.memory_space<smem>>
    %109 = arith.index_cast %arg1 : i32 to index
    %110 = memref.load %arg3[%109] : memref<4xf32, #tpu.memory_space<smem>>
    %111 = vector.broadcast %110 : f32 to vector<8x16xf32>
    %c0_17 = arith.constant 0 : index
    %c0_18 = arith.constant 0 : index
    %112 = vector.load %arg6[%c0_17, %c0_18] : memref<22x22xf32, #tpu.memory_space<vmem>>, vector<8x16xf32>
    %113 = vector.broadcast %12 : f32 to vector<8x16xf32>
    %114 = arith.mulf %113, %112 : vector<8x16xf32>
    %115 = arith.addf %111, %114 : vector<8x16xf32>
    %c0_19 = arith.constant 0 : index
    %c1_20 = arith.constant 1 : index
    %116 = vector.load %arg6[%c0_19, %c1_20] : memref<22x22xf32, #tpu.memory_space<vmem>>, vector<8x16xf32>
    %117 = vector.broadcast %14 : f32 to vector<8x16xf32>
    %118 = arith.mulf %117, %116 : vector<8x16xf32>
    %119 = arith.addf %115, %118 : vector<8x16xf32>
    %c0_21 = arith.constant 0 : index
    %c2_22 = arith.constant 2 : index
    %120 = vector.load %arg6[%c0_21, %c2_22] : memref<22x22xf32, #tpu.memory_space<vmem>>, vector<8x16xf32>
    %121 = vector.broadcast %16 : f32 to vector<8x16xf32>
    %122 = arith.mulf %121, %120 : vector<8x16xf32>
    %123 = arith.addf %119, %122 : vector<8x16xf32>
    %c0_23 = arith.constant 0 : index
    %c3_24 = arith.constant 3 : index
    %124 = vector.load %arg6[%c0_23, %c3_24] : memref<22x22xf32, #tpu.memory_space<vmem>>, vector<8x16xf32>
    %125 = vector.broadcast %18 : f32 to vector<8x16xf32>
    %126 = arith.mulf %125, %124 : vector<8x16xf32>
    %127 = arith.addf %123, %126 : vector<8x16xf32>
    %c0_25 = arith.constant 0 : index
    %c4_26 = arith.constant 4 : index
    %128 = vector.load %arg6[%c0_25, %c4_26] : memref<22x22xf32, #tpu.memory_space<vmem>>, vector<8x16xf32>
    %129 = vector.broadcast %20 : f32 to vector<8x16xf32>
    %130 = arith.mulf %129, %128 : vector<8x16xf32>
    %131 = arith.addf %127, %130 : vector<8x16xf32>
    %c0_27 = arith.constant 0 : index
    %c5_28 = arith.constant 5 : index
    %132 = vector.load %arg6[%c0_27, %c5_28] : memref<22x22xf32, #tpu.memory_space<vmem>>, vector<8x16xf32>
    %133 = vector.broadcast %22 : f32 to vector<8x16xf32>
    %134 = arith.mulf %133, %132 : vector<8x16xf32>
    %135 = arith.addf %131, %134 : vector<8x16xf32>
    %c0_29 = arith.constant 0 : index
    %c6_30 = arith.constant 6 : index
    %136 = vector.load %arg6[%c0_29, %c6_30] : memref<22x22xf32, #tpu.memory_space<vmem>>, vector<8x16xf32>
    %137 = vector.broadcast %24 : f32 to vector<8x16xf32>
    %138 = arith.mulf %137, %136 : vector<8x16xf32>
    %139 = arith.addf %135, %138 : vector<8x16xf32>
    %c1_31 = arith.constant 1 : index
    %c0_32 = arith.constant 0 : index
    %140 = vector.load %arg6[%c1_31, %c0_32] : memref<22x22xf32, #tpu.memory_space<vmem>>, vector<8x16xf32>
    %141 = vector.broadcast %26 : f32 to vector<8x16xf32>
    %142 = arith.mulf %141, %140 : vector<8x16xf32>
    %143 = arith.addf %139, %142 : vector<8x16xf32>
    %c1_33 = arith.constant 1 : index
    %c1_34 = arith.constant 1 : index
    %144 = vector.load %arg6[%c1_33, %c1_34] : memref<22x22xf32, #tpu.memory_space<vmem>>, vector<8x16xf32>
    %145 = vector.broadcast %28 : f32 to vector<8x16xf32>
    %146 = arith.mulf %145, %144 : vector<8x16xf32>
    %147 = arith.addf %143, %146 : vector<8x16xf32>
    %c1_35 = arith.constant 1 : index
    %c2_36 = arith.constant 2 : index
    %148 = vector.load %arg6[%c1_35, %c2_36] : memref<22x22xf32, #tpu.memory_space<vmem>>, vector<8x16xf32>
    %149 = vector.broadcast %30 : f32 to vector<8x16xf32>
    %150 = arith.mulf %149, %148 : vector<8x16xf32>
    %151 = arith.addf %147, %150 : vector<8x16xf32>
    %c1_37 = arith.constant 1 : index
    %c3_38 = arith.constant 3 : index
    %152 = vector.load %arg6[%c1_37, %c3_38] : memref<22x22xf32, #tpu.memory_space<vmem>>, vector<8x16xf32>
    %153 = vector.broadcast %32 : f32 to vector<8x16xf32>
    %154 = arith.mulf %153, %152 : vector<8x16xf32>
    %155 = arith.addf %151, %154 : vector<8x16xf32>
    %c1_39 = arith.constant 1 : index
    %c4_40 = arith.constant 4 : index
    %156 = vector.load %arg6[%c1_39, %c4_40] : memref<22x22xf32, #tpu.memory_space<vmem>>, vector<8x16xf32>
    %157 = vector.broadcast %34 : f32 to vector<8x16xf32>
    %158 = arith.mulf %157, %156 : vector<8x16xf32>
    %159 = arith.addf %155, %158 : vector<8x16xf32>
    %c1_41 = arith.constant 1 : index
    %c5_42 = arith.constant 5 : index
    %160 = vector.load %arg6[%c1_41, %c5_42] : memref<22x22xf32, #tpu.memory_space<vmem>>, vector<8x16xf32>
    %161 = vector.broadcast %36 : f32 to vector<8x16xf32>
    %162 = arith.mulf %161, %160 : vector<8x16xf32>
    %163 = arith.addf %159, %162 : vector<8x16xf32>
    %c1_43 = arith.constant 1 : index
    %c6_44 = arith.constant 6 : index
    %164 = vector.load %arg6[%c1_43, %c6_44] : memref<22x22xf32, #tpu.memory_space<vmem>>, vector<8x16xf32>
    %165 = vector.broadcast %38 : f32 to vector<8x16xf32>
    %166 = arith.mulf %165, %164 : vector<8x16xf32>
    %167 = arith.addf %163, %166 : vector<8x16xf32>
    %c2_45 = arith.constant 2 : index
    %c0_46 = arith.constant 0 : index
    %168 = vector.load %arg6[%c2_45, %c0_46] : memref<22x22xf32, #tpu.memory_space<vmem>>, vector<8x16xf32>
    %169 = vector.broadcast %40 : f32 to vector<8x16xf32>
    %170 = arith.mulf %169, %168 : vector<8x16xf32>
    %171 = arith.addf %167, %170 : vector<8x16xf32>
    %c2_47 = arith.constant 2 : index
    %c1_48 = arith.constant 1 : index
    %172 = vector.load %arg6[%c2_47, %c1_48] : memref<22x22xf32, #tpu.memory_space<vmem>>, vector<8x16xf32>
    %173 = vector.broadcast %42 : f32 to vector<8x16xf32>
    %174 = arith.mulf %173, %172 : vector<8x16xf32>
    %175 = arith.addf %171, %174 : vector<8x16xf32>
    %c2_49 = arith.constant 2 : index
    %c2_50 = arith.constant 2 : index
    %176 = vector.load %arg6[%c2_49, %c2_50] : memref<22x22xf32, #tpu.memory_space<vmem>>, vector<8x16xf32>
    %177 = vector.broadcast %44 : f32 to vector<8x16xf32>
    %178 = arith.mulf %177, %176 : vector<8x16xf32>
    %179 = arith.addf %175, %178 : vector<8x16xf32>
    %c2_51 = arith.constant 2 : index
    %c3_52 = arith.constant 3 : index
    %180 = vector.load %arg6[%c2_51, %c3_52] : memref<22x22xf32, #tpu.memory_space<vmem>>, vector<8x16xf32>
    %181 = vector.broadcast %46 : f32 to vector<8x16xf32>
    %182 = arith.mulf %181, %180 : vector<8x16xf32>
    %183 = arith.addf %179, %182 : vector<8x16xf32>
    %c2_53 = arith.constant 2 : index
    %c4_54 = arith.constant 4 : index
    %184 = vector.load %arg6[%c2_53, %c4_54] : memref<22x22xf32, #tpu.memory_space<vmem>>, vector<8x16xf32>
    %185 = vector.broadcast %48 : f32 to vector<8x16xf32>
    %186 = arith.mulf %185, %184 : vector<8x16xf32>
    %187 = arith.addf %183, %186 : vector<8x16xf32>
    %c2_55 = arith.constant 2 : index
    %c5_56 = arith.constant 5 : index
    %188 = vector.load %arg6[%c2_55, %c5_56] : memref<22x22xf32, #tpu.memory_space<vmem>>, vector<8x16xf32>
    %189 = vector.broadcast %50 : f32 to vector<8x16xf32>
    %190 = arith.mulf %189, %188 : vector<8x16xf32>
    %191 = arith.addf %187, %190 : vector<8x16xf32>
    %c2_57 = arith.constant 2 : index
    %c6_58 = arith.constant 6 : index
    %192 = vector.load %arg6[%c2_57, %c6_58] : memref<22x22xf32, #tpu.memory_space<vmem>>, vector<8x16xf32>
    %193 = vector.broadcast %52 : f32 to vector<8x16xf32>
    %194 = arith.mulf %193, %192 : vector<8x16xf32>
    %195 = arith.addf %191, %194 : vector<8x16xf32>
    %c3_59 = arith.constant 3 : index
    %c0_60 = arith.constant 0 : index
    %196 = vector.load %arg6[%c3_59, %c0_60] : memref<22x22xf32, #tpu.memory_space<vmem>>, vector<8x16xf32>
    %197 = vector.broadcast %54 : f32 to vector<8x16xf32>
    %198 = arith.mulf %197, %196 : vector<8x16xf32>
    %199 = arith.addf %195, %198 : vector<8x16xf32>
    %c3_61 = arith.constant 3 : index
    %c1_62 = arith.constant 1 : index
    %200 = vector.load %arg6[%c3_61, %c1_62] : memref<22x22xf32, #tpu.memory_space<vmem>>, vector<8x16xf32>
    %201 = vector.broadcast %56 : f32 to vector<8x16xf32>
    %202 = arith.mulf %201, %200 : vector<8x16xf32>
    %203 = arith.addf %199, %202 : vector<8x16xf32>
    %c3_63 = arith.constant 3 : index
    %c2_64 = arith.constant 2 : index
    %204 = vector.load %arg6[%c3_63, %c2_64] : memref<22x22xf32, #tpu.memory_space<vmem>>, vector<8x16xf32>
    %205 = vector.broadcast %58 : f32 to vector<8x16xf32>
    %206 = arith.mulf %205, %204 : vector<8x16xf32>
    %207 = arith.addf %203, %206 : vector<8x16xf32>
    %c3_65 = arith.constant 3 : index
    %c3_66 = arith.constant 3 : index
    %208 = vector.load %arg6[%c3_65, %c3_66] : memref<22x22xf32, #tpu.memory_space<vmem>>, vector<8x16xf32>
    %209 = vector.broadcast %60 : f32 to vector<8x16xf32>
    %210 = arith.mulf %209, %208 : vector<8x16xf32>
    %211 = arith.addf %207, %210 : vector<8x16xf32>
    %c3_67 = arith.constant 3 : index
    %c4_68 = arith.constant 4 : index
    %212 = vector.load %arg6[%c3_67, %c4_68] : memref<22x22xf32, #tpu.memory_space<vmem>>, vector<8x16xf32>
    %213 = vector.broadcast %62 : f32 to vector<8x16xf32>
    %214 = arith.mulf %213, %212 : vector<8x16xf32>
    %215 = arith.addf %211, %214 : vector<8x16xf32>
    %c3_69 = arith.constant 3 : index
    %c5_70 = arith.constant 5 : index
    %216 = vector.load %arg6[%c3_69, %c5_70] : memref<22x22xf32, #tpu.memory_space<vmem>>, vector<8x16xf32>
    %217 = vector.broadcast %64 : f32 to vector<8x16xf32>
    %218 = arith.mulf %217, %216 : vector<8x16xf32>
    %219 = arith.addf %215, %218 : vector<8x16xf32>
    %c3_71 = arith.constant 3 : index
    %c6_72 = arith.constant 6 : index
    %220 = vector.load %arg6[%c3_71, %c6_72] : memref<22x22xf32, #tpu.memory_space<vmem>>, vector<8x16xf32>
    %221 = vector.broadcast %66 : f32 to vector<8x16xf32>
    %222 = arith.mulf %221, %220 : vector<8x16xf32>
    %223 = arith.addf %219, %222 : vector<8x16xf32>
    %c4_73 = arith.constant 4 : index
    %c0_74 = arith.constant 0 : index
    %224 = vector.load %arg6[%c4_73, %c0_74] : memref<22x22xf32, #tpu.memory_space<vmem>>, vector<8x16xf32>
    %225 = vector.broadcast %68 : f32 to vector<8x16xf32>
    %226 = arith.mulf %225, %224 : vector<8x16xf32>
    %227 = arith.addf %223, %226 : vector<8x16xf32>
    %c4_75 = arith.constant 4 : index
    %c1_76 = arith.constant 1 : index
    %228 = vector.load %arg6[%c4_75, %c1_76] : memref<22x22xf32, #tpu.memory_space<vmem>>, vector<8x16xf32>
    %229 = vector.broadcast %70 : f32 to vector<8x16xf32>
    %230 = arith.mulf %229, %228 : vector<8x16xf32>
    %231 = arith.addf %227, %230 : vector<8x16xf32>
    %c4_77 = arith.constant 4 : index
    %c2_78 = arith.constant 2 : index
    %232 = vector.load %arg6[%c4_77, %c2_78] : memref<22x22xf32, #tpu.memory_space<vmem>>, vector<8x16xf32>
    %233 = vector.broadcast %72 : f32 to vector<8x16xf32>
    %234 = arith.mulf %233, %232 : vector<8x16xf32>
    %235 = arith.addf %231, %234 : vector<8x16xf32>
    %c4_79 = arith.constant 4 : index
    %c3_80 = arith.constant 3 : index
    %236 = vector.load %arg6[%c4_79, %c3_80] : memref<22x22xf32, #tpu.memory_space<vmem>>, vector<8x16xf32>
    %237 = vector.broadcast %74 : f32 to vector<8x16xf32>
    %238 = arith.mulf %237, %236 : vector<8x16xf32>
    %239 = arith.addf %235, %238 : vector<8x16xf32>
    %c4_81 = arith.constant 4 : index
    %c4_82 = arith.constant 4 : index
    %240 = vector.load %arg6[%c4_81, %c4_82] : memref<22x22xf32, #tpu.memory_space<vmem>>, vector<8x16xf32>
    %241 = vector.broadcast %76 : f32 to vector<8x16xf32>
    %242 = arith.mulf %241, %240 : vector<8x16xf32>
    %243 = arith.addf %239, %242 : vector<8x16xf32>
    %c4_83 = arith.constant 4 : index
    %c5_84 = arith.constant 5 : index
    %244 = vector.load %arg6[%c4_83, %c5_84] : memref<22x22xf32, #tpu.memory_space<vmem>>, vector<8x16xf32>
    %245 = vector.broadcast %78 : f32 to vector<8x16xf32>
    %246 = arith.mulf %245, %244 : vector<8x16xf32>
    %247 = arith.addf %243, %246 : vector<8x16xf32>
    %c4_85 = arith.constant 4 : index
    %c6_86 = arith.constant 6 : index
    %248 = vector.load %arg6[%c4_85, %c6_86] : memref<22x22xf32, #tpu.memory_space<vmem>>, vector<8x16xf32>
    %249 = vector.broadcast %80 : f32 to vector<8x16xf32>
    %250 = arith.mulf %249, %248 : vector<8x16xf32>
    %251 = arith.addf %247, %250 : vector<8x16xf32>
    %c5_87 = arith.constant 5 : index
    %c0_88 = arith.constant 0 : index
    %252 = vector.load %arg6[%c5_87, %c0_88] : memref<22x22xf32, #tpu.memory_space<vmem>>, vector<8x16xf32>
    %253 = vector.broadcast %82 : f32 to vector<8x16xf32>
    %254 = arith.mulf %253, %252 : vector<8x16xf32>
    %255 = arith.addf %251, %254 : vector<8x16xf32>
    %c5_89 = arith.constant 5 : index
    %c1_90 = arith.constant 1 : index
    %256 = vector.load %arg6[%c5_89, %c1_90] : memref<22x22xf32, #tpu.memory_space<vmem>>, vector<8x16xf32>
    %257 = vector.broadcast %84 : f32 to vector<8x16xf32>
    %258 = arith.mulf %257, %256 : vector<8x16xf32>
    %259 = arith.addf %255, %258 : vector<8x16xf32>
    %c5_91 = arith.constant 5 : index
    %c2_92 = arith.constant 2 : index
    %260 = vector.load %arg6[%c5_91, %c2_92] : memref<22x22xf32, #tpu.memory_space<vmem>>, vector<8x16xf32>
    %261 = vector.broadcast %86 : f32 to vector<8x16xf32>
    %262 = arith.mulf %261, %260 : vector<8x16xf32>
    %263 = arith.addf %259, %262 : vector<8x16xf32>
    %c5_93 = arith.constant 5 : index
    %c3_94 = arith.constant 3 : index
    %264 = vector.load %arg6[%c5_93, %c3_94] : memref<22x22xf32, #tpu.memory_space<vmem>>, vector<8x16xf32>
    %265 = vector.broadcast %88 : f32 to vector<8x16xf32>
    %266 = arith.mulf %265, %264 : vector<8x16xf32>
    %267 = arith.addf %263, %266 : vector<8x16xf32>
    %c5_95 = arith.constant 5 : index
    %c4_96 = arith.constant 4 : index
    %268 = vector.load %arg6[%c5_95, %c4_96] : memref<22x22xf32, #tpu.memory_space<vmem>>, vector<8x16xf32>
    %269 = vector.broadcast %90 : f32 to vector<8x16xf32>
    %270 = arith.mulf %269, %268 : vector<8x16xf32>
    %271 = arith.addf %267, %270 : vector<8x16xf32>
    %c5_97 = arith.constant 5 : index
    %c5_98 = arith.constant 5 : index
    %272 = vector.load %arg6[%c5_97, %c5_98] : memref<22x22xf32, #tpu.memory_space<vmem>>, vector<8x16xf32>
    %273 = vector.broadcast %92 : f32 to vector<8x16xf32>
    %274 = arith.mulf %273, %272 : vector<8x16xf32>
    %275 = arith.addf %271, %274 : vector<8x16xf32>
    %c5_99 = arith.constant 5 : index
    %c6_100 = arith.constant 6 : index
    %276 = vector.load %arg6[%c5_99, %c6_100] : memref<22x22xf32, #tpu.memory_space<vmem>>, vector<8x16xf32>
    %277 = vector.broadcast %94 : f32 to vector<8x16xf32>
    %278 = arith.mulf %277, %276 : vector<8x16xf32>
    %279 = arith.addf %275, %278 : vector<8x16xf32>
    %c6_101 = arith.constant 6 : index
    %c0_102 = arith.constant 0 : index
    %280 = vector.load %arg6[%c6_101, %c0_102] : memref<22x22xf32, #tpu.memory_space<vmem>>, vector<8x16xf32>
    %281 = vector.broadcast %96 : f32 to vector<8x16xf32>
    %282 = arith.mulf %281, %280 : vector<8x16xf32>
    %283 = arith.addf %279, %282 : vector<8x16xf32>
    %c6_103 = arith.constant 6 : index
    %c1_104 = arith.constant 1 : index
    %284 = vector.load %arg6[%c6_103, %c1_104] : memref<22x22xf32, #tpu.memory_space<vmem>>, vector<8x16xf32>
    %285 = vector.broadcast %98 : f32 to vector<8x16xf32>
    %286 = arith.mulf %285, %284 : vector<8x16xf32>
    %287 = arith.addf %283, %286 : vector<8x16xf32>
    %c6_105 = arith.constant 6 : index
    %c2_106 = arith.constant 2 : index
    %288 = vector.load %arg6[%c6_105, %c2_106] : memref<22x22xf32, #tpu.memory_space<vmem>>, vector<8x16xf32>
    %289 = vector.broadcast %100 : f32 to vector<8x16xf32>
    %290 = arith.mulf %289, %288 : vector<8x16xf32>
    %291 = arith.addf %287, %290 : vector<8x16xf32>
    %c6_107 = arith.constant 6 : index
    %c3_108 = arith.constant 3 : index
    %292 = vector.load %arg6[%c6_107, %c3_108] : memref<22x22xf32, #tpu.memory_space<vmem>>, vector<8x16xf32>
    %293 = vector.broadcast %102 : f32 to vector<8x16xf32>
    %294 = arith.mulf %293, %292 : vector<8x16xf32>
    %295 = arith.addf %291, %294 : vector<8x16xf32>
    %c6_109 = arith.constant 6 : index
    %c4_110 = arith.constant 4 : index
    %296 = vector.load %arg6[%c6_109, %c4_110] : memref<22x22xf32, #tpu.memory_space<vmem>>, vector<8x16xf32>
    %297 = vector.broadcast %104 : f32 to vector<8x16xf32>
    %298 = arith.mulf %297, %296 : vector<8x16xf32>
    %299 = arith.addf %295, %298 : vector<8x16xf32>
    %c6_111 = arith.constant 6 : index
    %c5_112 = arith.constant 5 : index
    %300 = vector.load %arg6[%c6_111, %c5_112] : memref<22x22xf32, #tpu.memory_space<vmem>>, vector<8x16xf32>
    %301 = vector.broadcast %106 : f32 to vector<8x16xf32>
    %302 = arith.mulf %301, %300 : vector<8x16xf32>
    %303 = arith.addf %299, %302 : vector<8x16xf32>
    %c6_113 = arith.constant 6 : index
    %c6_114 = arith.constant 6 : index
    %304 = vector.load %arg6[%c6_113, %c6_114] : memref<22x22xf32, #tpu.memory_space<vmem>>, vector<8x16xf32>
    %305 = vector.broadcast %108 : f32 to vector<8x16xf32>
    %306 = arith.mulf %305, %304 : vector<8x16xf32>
    %307 = arith.addf %303, %306 : vector<8x16xf32>
    %cst_115 = arith.constant 0.000000e+00 : f32
    %308 = vector.broadcast %cst_115 : f32 to vector<8x16xf32>
    %309 = arith.subf %308, %307 : vector<8x16xf32>
    %310 = math.exp %309 : vector<8x16xf32>
    %cst_116 = arith.constant 1.000000e+00 : f32
    %311 = vector.broadcast %cst_116 : f32 to vector<8x16xf32>
    %312 = arith.addf %311, %310 : vector<8x16xf32>
    %313 = tpu.reciprocal %312 : vector<8x16xf32> -> vector<8x16xf32>
    %c0_117 = arith.constant 0 : index
    %c0_118 = arith.constant 0 : index
    %c0_119 = arith.constant 0 : index
    %c0_120 = arith.constant 0 : index
    %314 = vector.load %arg4[%c0_117, %c0_118, %c0_119, %c0_120] : memref<1x1x16x16xf32, #tpu.memory_space<vmem>>, vector<1x1x8x16xf32>
    %315 = vector.shape_cast %314 : vector<1x1x8x16xf32> to vector<8x16xf32>
    %316 = arith.mulf %315, %313 : vector<8x16xf32>
    %c0_121 = arith.constant 0 : index
    %c0_122 = arith.constant 0 : index
    %c0_123 = arith.constant 0 : index
    %c0_124 = arith.constant 0 : index
    %317 = vector.load %arg5[%c0_121, %c0_122, %c0_123, %c0_124] : memref<1x1x16x16xf32, #tpu.memory_space<vmem>>, vector<1x1x8x16xf32>
    %318 = vector.shape_cast %317 : vector<1x1x8x16xf32> to vector<8x16xf32>
    %319 = vector.shape_cast %316 : vector<8x16xf32> to vector<1x1x8x16xf32>
    tpu.vector_store %arg5[%c0_121, %c0_122, %c0_123, %c0_124], %319 {strides = array<i32>} : memref<1x1x16x16xf32, #tpu.memory_space<vmem>>, vector<1x1x8x16xf32>,
    %320 = vector.broadcast %110 : f32 to vector<8x16xf32>
    %c8_125 = arith.constant 8 : index
    %c0_126 = arith.constant 0 : index
    %321 = vector.load %arg6[%c8_125, %c0_126] : memref<22x22xf32, #tpu.memory_space<vmem>>, vector<8x16xf32>
    %322 = vector.broadcast %12 : f32 to vector<8x16xf32>
    %323 = arith.mulf %322, %321 : vector<8x16xf32>
    %324 = arith.addf %320, %323 : vector<8x16xf32>
    %c8_127 = arith.constant 8 : index
    %c1_128 = arith.constant 1 : index
    %325 = vector.load %arg6[%c8_127, %c1_128] : memref<22x22xf32, #tpu.memory_space<vmem>>, vector<8x16xf32>
    %326 = vector.broadcast %14 : f32 to vector<8x16xf32>
    %327 = arith.mulf %326, %325 : vector<8x16xf32>
    %328 = arith.addf %324, %327 : vector<8x16xf32>
    %c8_129 = arith.constant 8 : index
    %c2_130 = arith.constant 2 : index
    %329 = vector.load %arg6[%c8_129, %c2_130] : memref<22x22xf32, #tpu.memory_space<vmem>>, vector<8x16xf32>
    %330 = vector.broadcast %16 : f32 to vector<8x16xf32>
    %331 = arith.mulf %330, %329 : vector<8x16xf32>
    %332 = arith.addf %328, %331 : vector<8x16xf32>
    %c8_131 = arith.constant 8 : index
    %c3_132 = arith.constant 3 : index
    %333 = vector.load %arg6[%c8_131, %c3_132] : memref<22x22xf32, #tpu.memory_space<vmem>>, vector<8x16xf32>
    %334 = vector.broadcast %18 : f32 to vector<8x16xf32>
    %335 = arith.mulf %334, %333 : vector<8x16xf32>
    %336 = arith.addf %332, %335 : vector<8x16xf32>
    %c8_133 = arith.constant 8 : index
    %c4_134 = arith.constant 4 : index
    %337 = vector.load %arg6[%c8_133, %c4_134] : memref<22x22xf32, #tpu.memory_space<vmem>>, vector<8x16xf32>
    %338 = vector.broadcast %20 : f32 to vector<8x16xf32>
    %339 = arith.mulf %338, %337 : vector<8x16xf32>
    %340 = arith.addf %336, %339 : vector<8x16xf32>
    %c8_135 = arith.constant 8 : index
    %c5_136 = arith.constant 5 : index
    %341 = vector.load %arg6[%c8_135, %c5_136] : memref<22x22xf32, #tpu.memory_space<vmem>>, vector<8x16xf32>
    %342 = vector.broadcast %22 : f32 to vector<8x16xf32>
    %343 = arith.mulf %342, %341 : vector<8x16xf32>
    %344 = arith.addf %340, %343 : vector<8x16xf32>
    %c8_137 = arith.constant 8 : index
    %c6_138 = arith.constant 6 : index
    %345 = vector.load %arg6[%c8_137, %c6_138] : memref<22x22xf32, #tpu.memory_space<vmem>>, vector<8x16xf32>
    %346 = vector.broadcast %24 : f32 to vector<8x16xf32>
    %347 = arith.mulf %346, %345 : vector<8x16xf32>
    %348 = arith.addf %344, %347 : vector<8x16xf32>
    %c9_139 = arith.constant 9 : index
    %c0_140 = arith.constant 0 : index
    %349 = vector.load %arg6[%c9_139, %c0_140] : memref<22x22xf32, #tpu.memory_space<vmem>>, vector<8x16xf32>
    %350 = vector.broadcast %26 : f32 to vector<8x16xf32>
    %351 = arith.mulf %350, %349 : vector<8x16xf32>
    %352 = arith.addf %348, %351 : vector<8x16xf32>
    %c9_141 = arith.constant 9 : index
    %c1_142 = arith.constant 1 : index
    %353 = vector.load %arg6[%c9_141, %c1_142] : memref<22x22xf32, #tpu.memory_space<vmem>>, vector<8x16xf32>
    %354 = vector.broadcast %28 : f32 to vector<8x16xf32>
    %355 = arith.mulf %354, %353 : vector<8x16xf32>
    %356 = arith.addf %352, %355 : vector<8x16xf32>
    %c9_143 = arith.constant 9 : index
    %c2_144 = arith.constant 2 : index
    %357 = vector.load %arg6[%c9_143, %c2_144] : memref<22x22xf32, #tpu.memory_space<vmem>>, vector<8x16xf32>
    %358 = vector.broadcast %30 : f32 to vector<8x16xf32>
    %359 = arith.mulf %358, %357 : vector<8x16xf32>
    %360 = arith.addf %356, %359 : vector<8x16xf32>
    %c9_145 = arith.constant 9 : index
    %c3_146 = arith.constant 3 : index
    %361 = vector.load %arg6[%c9_145, %c3_146] : memref<22x22xf32, #tpu.memory_space<vmem>>, vector<8x16xf32>
    %362 = vector.broadcast %32 : f32 to vector<8x16xf32>
    %363 = arith.mulf %362, %361 : vector<8x16xf32>
    %364 = arith.addf %360, %363 : vector<8x16xf32>
    %c9_147 = arith.constant 9 : index
    %c4_148 = arith.constant 4 : index
    %365 = vector.load %arg6[%c9_147, %c4_148] : memref<22x22xf32, #tpu.memory_space<vmem>>, vector<8x16xf32>
    %366 = vector.broadcast %34 : f32 to vector<8x16xf32>
    %367 = arith.mulf %366, %365 : vector<8x16xf32>
    %368 = arith.addf %364, %367 : vector<8x16xf32>
    %c9_149 = arith.constant 9 : index
    %c5_150 = arith.constant 5 : index
    %369 = vector.load %arg6[%c9_149, %c5_150] : memref<22x22xf32, #tpu.memory_space<vmem>>, vector<8x16xf32>
    %370 = vector.broadcast %36 : f32 to vector<8x16xf32>
    %371 = arith.mulf %370, %369 : vector<8x16xf32>
    %372 = arith.addf %368, %371 : vector<8x16xf32>
    %c9_151 = arith.constant 9 : index
    %c6_152 = arith.constant 6 : index
    %373 = vector.load %arg6[%c9_151, %c6_152] : memref<22x22xf32, #tpu.memory_space<vmem>>, vector<8x16xf32>
    %374 = vector.broadcast %38 : f32 to vector<8x16xf32>
    %375 = arith.mulf %374, %373 : vector<8x16xf32>
    %376 = arith.addf %372, %375 : vector<8x16xf32>
    %c10_153 = arith.constant 10 : index
    %c0_154 = arith.constant 0 : index
    %377 = vector.load %arg6[%c10_153, %c0_154] : memref<22x22xf32, #tpu.memory_space<vmem>>, vector<8x16xf32>
    %378 = vector.broadcast %40 : f32 to vector<8x16xf32>
    %379 = arith.mulf %378, %377 : vector<8x16xf32>
    %380 = arith.addf %376, %379 : vector<8x16xf32>
    %c10_155 = arith.constant 10 : index
    %c1_156 = arith.constant 1 : index
    %381 = vector.load %arg6[%c10_155, %c1_156] : memref<22x22xf32, #tpu.memory_space<vmem>>, vector<8x16xf32>
    %382 = vector.broadcast %42 : f32 to vector<8x16xf32>
    %383 = arith.mulf %382, %381 : vector<8x16xf32>
    %384 = arith.addf %380, %383 : vector<8x16xf32>
    %c10_157 = arith.constant 10 : index
    %c2_158 = arith.constant 2 : index
    %385 = vector.load %arg6[%c10_157, %c2_158] : memref<22x22xf32, #tpu.memory_space<vmem>>, vector<8x16xf32>
    %386 = vector.broadcast %44 : f32 to vector<8x16xf32>
    %387 = arith.mulf %386, %385 : vector<8x16xf32>
    %388 = arith.addf %384, %387 : vector<8x16xf32>
    %c10_159 = arith.constant 10 : index
    %c3_160 = arith.constant 3 : index
    %389 = vector.load %arg6[%c10_159, %c3_160] : memref<22x22xf32, #tpu.memory_space<vmem>>, vector<8x16xf32>
    %390 = vector.broadcast %46 : f32 to vector<8x16xf32>
    %391 = arith.mulf %390, %389 : vector<8x16xf32>
    %392 = arith.addf %388, %391 : vector<8x16xf32>
    %c10_161 = arith.constant 10 : index
    %c4_162 = arith.constant 4 : index
    %393 = vector.load %arg6[%c10_161, %c4_162] : memref<22x22xf32, #tpu.memory_space<vmem>>, vector<8x16xf32>
    %394 = vector.broadcast %48 : f32 to vector<8x16xf32>
    %395 = arith.mulf %394, %393 : vector<8x16xf32>
    %396 = arith.addf %392, %395 : vector<8x16xf32>
    %c10_163 = arith.constant 10 : index
    %c5_164 = arith.constant 5 : index
    %397 = vector.load %arg6[%c10_163, %c5_164] : memref<22x22xf32, #tpu.memory_space<vmem>>, vector<8x16xf32>
    %398 = vector.broadcast %50 : f32 to vector<8x16xf32>
    %399 = arith.mulf %398, %397 : vector<8x16xf32>
    %400 = arith.addf %396, %399 : vector<8x16xf32>
    %c10_165 = arith.constant 10 : index
    %c6_166 = arith.constant 6 : index
    %401 = vector.load %arg6[%c10_165, %c6_166] : memref<22x22xf32, #tpu.memory_space<vmem>>, vector<8x16xf32>
    %402 = vector.broadcast %52 : f32 to vector<8x16xf32>
    %403 = arith.mulf %402, %401 : vector<8x16xf32>
    %404 = arith.addf %400, %403 : vector<8x16xf32>
    %c11_167 = arith.constant 11 : index
    %c0_168 = arith.constant 0 : index
    %405 = vector.load %arg6[%c11_167, %c0_168] : memref<22x22xf32, #tpu.memory_space<vmem>>, vector<8x16xf32>
    %406 = vector.broadcast %54 : f32 to vector<8x16xf32>
    %407 = arith.mulf %406, %405 : vector<8x16xf32>
    %408 = arith.addf %404, %407 : vector<8x16xf32>
    %c11_169 = arith.constant 11 : index
    %c1_170 = arith.constant 1 : index
    %409 = vector.load %arg6[%c11_169, %c1_170] : memref<22x22xf32, #tpu.memory_space<vmem>>, vector<8x16xf32>
    %410 = vector.broadcast %56 : f32 to vector<8x16xf32>
    %411 = arith.mulf %410, %409 : vector<8x16xf32>
    %412 = arith.addf %408, %411 : vector<8x16xf32>
    %c11_171 = arith.constant 11 : index
    %c2_172 = arith.constant 2 : index
    %413 = vector.load %arg6[%c11_171, %c2_172] : memref<22x22xf32, #tpu.memory_space<vmem>>, vector<8x16xf32>
    %414 = vector.broadcast %58 : f32 to vector<8x16xf32>
    %415 = arith.mulf %414, %413 : vector<8x16xf32>
    %416 = arith.addf %412, %415 : vector<8x16xf32>
    %c11_173 = arith.constant 11 : index
    %c3_174 = arith.constant 3 : index
    %417 = vector.load %arg6[%c11_173, %c3_174] : memref<22x22xf32, #tpu.memory_space<vmem>>, vector<8x16xf32>
    %418 = vector.broadcast %60 : f32 to vector<8x16xf32>
    %419 = arith.mulf %418, %417 : vector<8x16xf32>
    %420 = arith.addf %416, %419 : vector<8x16xf32>
    %c11_175 = arith.constant 11 : index
    %c4_176 = arith.constant 4 : index
    %421 = vector.load %arg6[%c11_175, %c4_176] : memref<22x22xf32, #tpu.memory_space<vmem>>, vector<8x16xf32>
    %422 = vector.broadcast %62 : f32 to vector<8x16xf32>
    %423 = arith.mulf %422, %421 : vector<8x16xf32>
    %424 = arith.addf %420, %423 : vector<8x16xf32>
    %c11_177 = arith.constant 11 : index
    %c5_178 = arith.constant 5 : index
    %425 = vector.load %arg6[%c11_177, %c5_178] : memref<22x22xf32, #tpu.memory_space<vmem>>, vector<8x16xf32>
    %426 = vector.broadcast %64 : f32 to vector<8x16xf32>
    %427 = arith.mulf %426, %425 : vector<8x16xf32>
    %428 = arith.addf %424, %427 : vector<8x16xf32>
    %c11_179 = arith.constant 11 : index
    %c6_180 = arith.constant 6 : index
    %429 = vector.load %arg6[%c11_179, %c6_180] : memref<22x22xf32, #tpu.memory_space<vmem>>, vector<8x16xf32>
    %430 = vector.broadcast %66 : f32 to vector<8x16xf32>
    %431 = arith.mulf %430, %429 : vector<8x16xf32>
    %432 = arith.addf %428, %431 : vector<8x16xf32>
    %c12_181 = arith.constant 12 : index
    %c0_182 = arith.constant 0 : index
    %433 = vector.load %arg6[%c12_181, %c0_182] : memref<22x22xf32, #tpu.memory_space<vmem>>, vector<8x16xf32>
    %434 = vector.broadcast %68 : f32 to vector<8x16xf32>
    %435 = arith.mulf %434, %433 : vector<8x16xf32>
    %436 = arith.addf %432, %435 : vector<8x16xf32>
    %c12_183 = arith.constant 12 : index
    %c1_184 = arith.constant 1 : index
    %437 = vector.load %arg6[%c12_183, %c1_184] : memref<22x22xf32, #tpu.memory_space<vmem>>, vector<8x16xf32>
    %438 = vector.broadcast %70 : f32 to vector<8x16xf32>
    %439 = arith.mulf %438, %437 : vector<8x16xf32>
    %440 = arith.addf %436, %439 : vector<8x16xf32>
    %c12_185 = arith.constant 12 : index
    %c2_186 = arith.constant 2 : index
    %441 = vector.load %arg6[%c12_185, %c2_186] : memref<22x22xf32, #tpu.memory_space<vmem>>, vector<8x16xf32>
    %442 = vector.broadcast %72 : f32 to vector<8x16xf32>
    %443 = arith.mulf %442, %441 : vector<8x16xf32>
    %444 = arith.addf %440, %443 : vector<8x16xf32>
    %c12_187 = arith.constant 12 : index
    %c3_188 = arith.constant 3 : index
    %445 = vector.load %arg6[%c12_187, %c3_188] : memref<22x22xf32, #tpu.memory_space<vmem>>, vector<8x16xf32>
    %446 = vector.broadcast %74 : f32 to vector<8x16xf32>
    %447 = arith.mulf %446, %445 : vector<8x16xf32>
    %448 = arith.addf %444, %447 : vector<8x16xf32>
    %c12_189 = arith.constant 12 : index
    %c4_190 = arith.constant 4 : index
    %449 = vector.load %arg6[%c12_189, %c4_190] : memref<22x22xf32, #tpu.memory_space<vmem>>, vector<8x16xf32>
    %450 = vector.broadcast %76 : f32 to vector<8x16xf32>
    %451 = arith.mulf %450, %449 : vector<8x16xf32>
    %452 = arith.addf %448, %451 : vector<8x16xf32>
    %c12_191 = arith.constant 12 : index
    %c5_192 = arith.constant 5 : index
    %453 = vector.load %arg6[%c12_191, %c5_192] : memref<22x22xf32, #tpu.memory_space<vmem>>, vector<8x16xf32>
    %454 = vector.broadcast %78 : f32 to vector<8x16xf32>
    %455 = arith.mulf %454, %453 : vector<8x16xf32>
    %456 = arith.addf %452, %455 : vector<8x16xf32>
    %c12_193 = arith.constant 12 : index
    %c6_194 = arith.constant 6 : index
    %457 = vector.load %arg6[%c12_193, %c6_194] : memref<22x22xf32, #tpu.memory_space<vmem>>, vector<8x16xf32>
    %458 = vector.broadcast %80 : f32 to vector<8x16xf32>
    %459 = arith.mulf %458, %457 : vector<8x16xf32>
    %460 = arith.addf %456, %459 : vector<8x16xf32>
    %c13_195 = arith.constant 13 : index
    %c0_196 = arith.constant 0 : index
    %461 = vector.load %arg6[%c13_195, %c0_196] : memref<22x22xf32, #tpu.memory_space<vmem>>, vector<8x16xf32>
    %462 = vector.broadcast %82 : f32 to vector<8x16xf32>
    %463 = arith.mulf %462, %461 : vector<8x16xf32>
    %464 = arith.addf %460, %463 : vector<8x16xf32>
    %c13_197 = arith.constant 13 : index
    %c1_198 = arith.constant 1 : index
    %465 = vector.load %arg6[%c13_197, %c1_198] : memref<22x22xf32, #tpu.memory_space<vmem>>, vector<8x16xf32>
    %466 = vector.broadcast %84 : f32 to vector<8x16xf32>
    %467 = arith.mulf %466, %465 : vector<8x16xf32>
    %468 = arith.addf %464, %467 : vector<8x16xf32>
    %c13_199 = arith.constant 13 : index
    %c2_200 = arith.constant 2 : index
    %469 = vector.load %arg6[%c13_199, %c2_200] : memref<22x22xf32, #tpu.memory_space<vmem>>, vector<8x16xf32>
    %470 = vector.broadcast %86 : f32 to vector<8x16xf32>
    %471 = arith.mulf %470, %469 : vector<8x16xf32>
    %472 = arith.addf %468, %471 : vector<8x16xf32>
    %c13_201 = arith.constant 13 : index
    %c3_202 = arith.constant 3 : index
    %473 = vector.load %arg6[%c13_201, %c3_202] : memref<22x22xf32, #tpu.memory_space<vmem>>, vector<8x16xf32>
    %474 = vector.broadcast %88 : f32 to vector<8x16xf32>
    %475 = arith.mulf %474, %473 : vector<8x16xf32>
    %476 = arith.addf %472, %475 : vector<8x16xf32>
    %c13_203 = arith.constant 13 : index
    %c4_204 = arith.constant 4 : index
    %477 = vector.load %arg6[%c13_203, %c4_204] : memref<22x22xf32, #tpu.memory_space<vmem>>, vector<8x16xf32>
    %478 = vector.broadcast %90 : f32 to vector<8x16xf32>
    %479 = arith.mulf %478, %477 : vector<8x16xf32>
    %480 = arith.addf %476, %479 : vector<8x16xf32>
    %c13_205 = arith.constant 13 : index
    %c5_206 = arith.constant 5 : index
    %481 = vector.load %arg6[%c13_205, %c5_206] : memref<22x22xf32, #tpu.memory_space<vmem>>, vector<8x16xf32>
    %482 = vector.broadcast %92 : f32 to vector<8x16xf32>
    %483 = arith.mulf %482, %481 : vector<8x16xf32>
    %484 = arith.addf %480, %483 : vector<8x16xf32>
    %c13_207 = arith.constant 13 : index
    %c6_208 = arith.constant 6 : index
    %485 = vector.load %arg6[%c13_207, %c6_208] : memref<22x22xf32, #tpu.memory_space<vmem>>, vector<8x16xf32>
    %486 = vector.broadcast %94 : f32 to vector<8x16xf32>
    %487 = arith.mulf %486, %485 : vector<8x16xf32>
    %488 = arith.addf %484, %487 : vector<8x16xf32>
    %c14_209 = arith.constant 14 : index
    %c0_210 = arith.constant 0 : index
    %489 = vector.load %arg6[%c14_209, %c0_210] : memref<22x22xf32, #tpu.memory_space<vmem>>, vector<8x16xf32>
    %490 = vector.broadcast %96 : f32 to vector<8x16xf32>
    %491 = arith.mulf %490, %489 : vector<8x16xf32>
    %492 = arith.addf %488, %491 : vector<8x16xf32>
    %c14_211 = arith.constant 14 : index
    %c1_212 = arith.constant 1 : index
    %493 = vector.load %arg6[%c14_211, %c1_212] : memref<22x22xf32, #tpu.memory_space<vmem>>, vector<8x16xf32>
    %494 = vector.broadcast %98 : f32 to vector<8x16xf32>
    %495 = arith.mulf %494, %493 : vector<8x16xf32>
    %496 = arith.addf %492, %495 : vector<8x16xf32>
    %c14_213 = arith.constant 14 : index
    %c2_214 = arith.constant 2 : index
    %497 = vector.load %arg6[%c14_213, %c2_214] : memref<22x22xf32, #tpu.memory_space<vmem>>, vector<8x16xf32>
    %498 = vector.broadcast %100 : f32 to vector<8x16xf32>
    %499 = arith.mulf %498, %497 : vector<8x16xf32>
    %500 = arith.addf %496, %499 : vector<8x16xf32>
    %c14_215 = arith.constant 14 : index
    %c3_216 = arith.constant 3 : index
    %501 = vector.load %arg6[%c14_215, %c3_216] : memref<22x22xf32, #tpu.memory_space<vmem>>, vector<8x16xf32>
    %502 = vector.broadcast %102 : f32 to vector<8x16xf32>
    %503 = arith.mulf %502, %501 : vector<8x16xf32>
    %504 = arith.addf %500, %503 : vector<8x16xf32>
    %c14_217 = arith.constant 14 : index
    %c4_218 = arith.constant 4 : index
    %505 = vector.load %arg6[%c14_217, %c4_218] : memref<22x22xf32, #tpu.memory_space<vmem>>, vector<8x16xf32>
    %506 = vector.broadcast %104 : f32 to vector<8x16xf32>
    %507 = arith.mulf %506, %505 : vector<8x16xf32>
    %508 = arith.addf %504, %507 : vector<8x16xf32>
    %c14_219 = arith.constant 14 : index
    %c5_220 = arith.constant 5 : index
    %509 = vector.load %arg6[%c14_219, %c5_220] : memref<22x22xf32, #tpu.memory_space<vmem>>, vector<8x16xf32>
    %510 = vector.broadcast %106 : f32 to vector<8x16xf32>
    %511 = arith.mulf %510, %509 : vector<8x16xf32>
    %512 = arith.addf %508, %511 : vector<8x16xf32>
    %c14_221 = arith.constant 14 : index
    %c6_222 = arith.constant 6 : index
    %513 = vector.load %arg6[%c14_221, %c6_222] : memref<22x22xf32, #tpu.memory_space<vmem>>, vector<8x16xf32>
    %514 = vector.broadcast %108 : f32 to vector<8x16xf32>
    %515 = arith.mulf %514, %513 : vector<8x16xf32>
    %516 = arith.addf %512, %515 : vector<8x16xf32>
    %cst_223 = arith.constant 0.000000e+00 : f32
    %517 = vector.broadcast %cst_223 : f32 to vector<8x16xf32>
    %518 = arith.subf %517, %516 : vector<8x16xf32>
    %519 = math.exp %518 : vector<8x16xf32>
    %cst_224 = arith.constant 1.000000e+00 : f32
    %520 = vector.broadcast %cst_224 : f32 to vector<8x16xf32>
    %521 = arith.addf %520, %519 : vector<8x16xf32>
    %522 = tpu.reciprocal %521 : vector<8x16xf32> -> vector<8x16xf32>
    %c0_225 = arith.constant 0 : index
    %c0_226 = arith.constant 0 : index
    %c8_227 = arith.constant 8 : index
    %c0_228 = arith.constant 0 : index
    %523 = vector.load %arg4[%c0_225, %c0_226, %c8_227, %c0_228] : memref<1x1x16x16xf32, #tpu.memory_space<vmem>>, vector<1x1x8x16xf32>
    %524 = vector.shape_cast %523 : vector<1x1x8x16xf32> to vector<8x16xf32>
    %525 = arith.mulf %524, %522 : vector<8x16xf32>
    %c0_229 = arith.constant 0 : index
    %c0_230 = arith.constant 0 : index
    %c8_231 = arith.constant 8 : index
    %c0_232 = arith.constant 0 : index
    %526 = vector.load %arg5[%c0_229, %c0_230, %c8_231, %c0_232] : memref<1x1x16x16xf32, #tpu.memory_space<vmem>>, vector<1x1x8x16xf32>
    %527 = vector.shape_cast %526 : vector<1x1x8x16xf32> to vector<8x16xf32>
    %528 = vector.shape_cast %525 : vector<8x16xf32> to vector<1x1x8x16xf32>
    tpu.vector_store %arg5[%c0_229, %c0_230, %c8_231, %c0_232], %528 {strides = array<i32>} : memref<1x1x16x16xf32, #tpu.memory_space<vmem>>, vector<1x1x8x16xf32>,
    return
  }
  func.func @transform_0(%arg0: i32, %arg1: i32, %arg2: memref<4x49xf32, #tpu.memory_space<smem>>, %arg3: memref<4xf32, #tpu.memory_space<smem>>) -> (i32, i32, i32, i32) {
    %c0_i32 = arith.constant 0 : i32
    %c0_i32_0 = arith.constant 0 : i32
    %c0_i32_1 = arith.constant 0 : i32
    return %arg0, %arg1, %c0_i32, %c0_i32_0 : i32, i32, i32, i32
  }
  func.func @transform_1(%arg0: i32, %arg1: i32, %arg2: memref<4x49xf32, #tpu.memory_space<smem>>, %arg3: memref<4xf32, #tpu.memory_space<smem>>) -> (i32, i32, i32, i32) {
    %c0_i32 = arith.constant 0 : i32
    %c0_i32_0 = arith.constant 0 : i32
    %c0_i32_1 = arith.constant 0 : i32
    return %arg0, %arg1, %c0_i32, %c0_i32_0 : i32, i32, i32, i32
  }
}

</mosaic_0001>

<llo_original>
// kernel: tpu_custom_call.1
$region0: #{tpu_custom_call.1}
  #allocation0 [shape = 'u32[]', space=smem, size = 0x4, offset = 0x4, fixed_abs, tag = 'smem constant byte address 0x4 - core index']
  #allocation1 [shape = 'u32[144,128]{1,0:T(1,128)}', space=vmem, size = 0x12000, scoped, tag = 'internal scratch']
  #allocation2 [shape = 'f32[22,22]{1,0:T(8,128)}', space=vmem, size = 0x3000, scoped, tag = 'scratch operand']
  #allocation3 [shape = 's32[1]{0}', space=sflag, size = 0x4, scoped, tag = 'scoped memory for tpu_custom_call.1']
  #allocation4 [shape = 'u8[2048]{0}', space=smem, size = 0x800, scoped, tag = 'prefetched SMEM operand 0']
  #allocation5 [shape = 'u8[512]{0}', space=smem, size = 0x200, scoped, tag = 'prefetched SMEM operand 1']
  %s0 = inlined_call_operand.hbm [shape: f32[4,49], index: 0, kind: input, shape index: {}]
  %s1 = inlined_call_operand.vmem [shape: f32[4], index: 1, kind: input, shape index: {}]
  %s2 = inlined_call_operand.hbm [shape: f32[2,4,16,16], index: 2, kind: input, shape index: {}]
  %s3 = inlined_call_operand.hbm [shape: f32[2,4,16,16], index: 3, kind: output, shape index: {}]
  %s4 = sld [smem:[#allocation0]]
  $region41: #{tpu_custom_call.1} parent=0
    _
  %s6 = ssub.s32 1, %s4
  %s7 = scalar_select 0, %s6, %s4
  %9 = dma.hbm_to_smem %s0, 64, [#allocation4], [#allocation3]
  %s10 = sshll.u32 %s1, 4
  %s11 = int_to_ptr.vmem [resolvable:$true] %s10
  %13 = dma.vmem_to_smem %s11, 16, [#allocation5], [#allocation3]
  %14 = dma.done [#allocation3], 80
  %15 = sfence
  $region1: #{tpu_custom_call.1} parent=0
    #allocation6 [shape = 'u8[16384]{0}', space=vmem, size = 0x4000, scoped, tag = 'input window, operand 2']
    #allocation7 [shape = 's32[2]{0}', space=sflag, size = 0x8, scoped, tag = 'scoped memory for tpu_custom_call.1']
    #allocation8 [shape = 's32[2]{0}', space=sflag, size = 0x8, scoped, tag = 'scoped memory for tpu_custom_call.1']
    #allocation9 [shape = 'u8[16384]{0}', space=vmem, size = 0x4000, scoped, tag = 'output window, operand 0']
    %16 = vsyncpa [#allocation7], 0
    %s17 = scalar_lea.sflag [#allocation7], 1
    %18 = vsyncpa %s17, 0
    %19 = vsyncpa [#allocation8], 0
    %s20 = scalar_lea.sflag [#allocation8], 1
    %21 = vsyncpa %s20, 0
    loop: start=0, step=1, limit=10
    $region2: #{tpu_custom_call.1} parent=1 // loop_pre_header
      _
    $region3: #{tpu_custom_call.1} parent=1 // loop_header
      %s23 = sphi 0, %s27
      %p24 = scmp.ge.s32.totalorder %s23, 10
      %s30 = sphi 0, %s42
      %s31 = sphi 0, %s38
      %s32 = sphi 0, %s30
      %s33 = sphi 0, %s31
      %s34 = sphi 0, %s32
      %s35 = sphi 0, %s33
      %s47 = sphi 0, %s49
      %s50 = sphi 0, %s47
      %s51 = sphi 0, %s50
      %s67 = sphi 0, %s51
      %s75 = sphi 0, %s77
      %s78 = sphi 0, %s75
      %s79 = sphi 0, %s78
      %s95 = sphi 0, %s79
    $region4: #{tpu_custom_call.1} parent=1 // loop_header_branch
      %26 = sbr.rel (%p24) target = $region8
    $region5: #{tpu_custom_call.1} parent=1 // loop_body
      %s28 = ssub.s32 %s23, 1
      %s29 = ssub.s32 %s23, 2
      %s36 = sadd.s32 1, %s31
      %p37 = scmp.ge.s32.totalorder %s36, 4
      %s38 = scalar_select %p37, 0, %s36
      %s39 = sadd.s32 1, %s30
      %s40 = scalar_select %p37, %s39, %s30
      %p41 = scmp.ge.s32.totalorder %s40, 2
      %s42 = scalar_select %p41, 0, %s40
      %s43 = ssub.s32 %s30, %s42
      %s44 = ssub.s32 %s31, %s38
      %s45 = sor.u32 %s43, %s44
      %p46 = scmp.eq.s32.totalorder %s45, 0
      %s48 = sadd.s32 %s47, 1
      %s49 = scalar_select %p46, %s47, %s48
      %p52 = pneg %p46
      %p53 = scmp.eq.s32.totalorder %s23, 7
      %p54 = por %p52, %p53
      %p55 = scmp.ne.s32.totalorder %s47, %s50
      %p56 = scmp.eq.s32.totalorder %s23, 0
      %p57 = por %p55, %p56
      %p58 = scmp.ne.s32.totalorder %s47, %s50
      %p59 = scmp.eq.s32.totalorder %s28, 7
      %p60 = por %p58, %p59
      %p61 = scmp.ne.s32.totalorder %s50, %s51
      %p62 = scmp.eq.s32.totalorder %s28, 0
      %p63 = por %p61, %p62
      %p64 = scmp.ne.s32.totalorder %s50, %s51
      %p65 = scmp.eq.s32.totalorder %s29, 7
      %p66 = por %p64, %p65
      %p68 = scmp.ne.s32.totalorder %s51, %s67
      %p69 = scmp.eq.s32.totalorder %s29, 0
      %p70 = por %p68, %p69
      %s71 = ssub.s32 %s30, %s42
      %s72 = ssub.s32 %s31, %s38
      %s73 = sor.u32 %s71, %s72
      %p74 = scmp.eq.s32.totalorder %s73, 0
      %s76 = sadd.s32 %s75, 1
      %s77 = scalar_select %p74, %s75, %s76
      %p80 = pneg %p74
      %p81 = scmp.eq.s32.totalorder %s23, 7
      %p82 = por %p80, %p81
      %p83 = scmp.ne.s32.totalorder %s75, %s78
      %p84 = scmp.eq.s32.totalorder %s23, 0
      %p85 = por %p83, %p84
      %p86 = scmp.ne.s32.totalorder %s75, %s78
      %p87 = scmp.eq.s32.totalorder %s28, 7
      %p88 = por %p86, %p87
      %p89 = scmp.ne.s32.totalorder %s78, %s79
      %p90 = scmp.eq.s32.totalorder %s28, 0
      %p91 = por %p89, %p90
      %p92 = scmp.ne.s32.totalorder %s78, %s79
      %p93 = scmp.eq.s32.totalorder %s29, 7
      %p94 = por %p92, %p93
      %p96 = scmp.ne.s32.totalorder %s79, %s95
      %p97 = scmp.eq.s32.totalorder %s29, 0
      %p98 = por %p96, %p97
      %p99 = scmp.le.s32.totalorder 1, %s23
      %p100 = scmp.lt.s32.totalorder %s23, 9
      %p101 = pnand %p99, %p100
      %p102 = pneg %p101
      // Predicated region
      $region9: #{tpu_custom_call.1} parent=5 // pred_check
        _
      $region10: #{tpu_custom_call.1} parent=5 // pred_check_branch
        %104 = sbr.rel (%p101) target = $region12
      $region11: #{tpu_custom_call.1} parent=5 // pred_region
        %s105 = ssub.s32 %s23, 1
      $region12: #{tpu_custom_call.1} parent=5 // pred_fallthru
        _
      %p106 = scmp.lt.s32.totalorder %s23, 8
      // Predicated region
      $region13: #{tpu_custom_call.1} parent=5 // pred_check
        %p107 = pneg %p106
      $region14: #{tpu_custom_call.1} parent=5 // pred_check_branch
        %109 = sbr.rel (%p107) target = $region16
      $region15: #{tpu_custom_call.1} parent=5 // pred_region
        // Predicated region
        $region17: #{tpu_custom_call.1} parent=15 // pred_check
          %p110 = pneg %p57
        $region18: #{tpu_custom_call.1} parent=15 // pred_check_branch
          %112 = sbr.rel (%p110) target = $region20
        $region19: #{tpu_custom_call.1} parent=15 // pred_region
          %s113 = sand.u32 %s47, 1
          %s114 = scalar_lea.sflag [#allocation7], %s113
          %s115 = sand.u32 %s47, 1
          %s116 = smul.addr %s115, 16
          %s117 = scalar_lea.vmem [#allocation6], %s116
          %s119 = ssub.s32 256, 256
          %120 = vsyncadd %s114, %s119
          %s121 = smul.addr %s31, 2
          %s122 = smul.addr %s30, 8
          %s123 = sadd.s32 %s121, %s122
          %s124 = smul.addr %s123, 128
          %s125 = scalar_lea.hbm %s2, %s124
          %s126 = sshll.u32 %s117, 4
          %s127 = int_to_ptr.vmem [resolvable:$true] %s126
          %132 = dma.hbm_to_vmem [thread:$0]  %s125, 256, %s127, %s114, 128, 128, 8
        $region20: #{tpu_custom_call.1} parent=15 // pred_fallthru
          _
      $region16: #{tpu_custom_call.1} parent=5 // pred_fallthru
        _
      %p133 = scmp.le.s32.totalorder 1, %s23
      %p134 = scmp.lt.s32.totalorder %s23, 9
      %p135 = pnand %p133, %p134
      %p136 = pneg %p135
      // Predicated region
      $region21: #{tpu_custom_call.1} parent=5 // pred_check
        _
      $region22: #{tpu_custom_call.1} parent=5 // pred_check_branch
        %138 = sbr.rel (%p135) target = $region24
      $region23: #{tpu_custom_call.1} parent=5 // pred_region
        %s139 = ssub.s32 %s23, 1
        %s140 = sand.u32 %s50, 1
        %s141 = scalar_lea.sflag [#allocation7], %s140
        %s142 = sand.u32 %s50, 1
        %s143 = smul.addr %s142, 16
        %s144 = scalar_lea.vmem [#allocation6], %s143
        // Predicated region
        $region25: #{tpu_custom_call.1} parent=23 // pred_check
          %p145 = pneg %p63
        $region26: #{tpu_custom_call.1} parent=23 // pred_check_branch
          %147 = sbr.rel (%p145) target = $region28
        $region27: #{tpu_custom_call.1} parent=23 // pred_region
          %148 = dma.done %s141, 256
        $region28: #{tpu_custom_call.1} parent=23 // pred_fallthru
          _
        %s149 = sand.u32 %s50, 1
        %s150 = scalar_lea.sflag [#allocation7], %s149
        %s151 = sand.u32 %s50, 1
        %s152 = smul.addr %s151, 16
        %s153 = scalar_lea.vmem [#allocation6], %s152
        %p154 = pneg %p63
        %p155 = pneg %p60
        %p156 = pneg %p91
        %p157 = pneg %p88
        %s158 = sand.u32 %s78, 1
        %s159 = scalar_lea.sflag [#allocation8], %s158
        %s160 = sand.u32 %s78, 1
        %s161 = smul.addr %s160, 16
        %s162 = scalar_lea.vmem [#allocation9], %s161
        %vm163 = vcmask 174080
        %164 = vst.msk [vmem:[#allocation2] sm:$0x7] %vm163, 0.0
        %165 = vst.msk [vmem:[#allocation2 + $0x13] sm:$0x7] %vm163, 0.0
        %vm166 = vcmask 23552
        %167 = vst.msk [vmem:[#allocation2] sm:$0xff] %vm166, 0.0
        %168 = vst.msk [vmem:[#allocation2 + $0x8] sm:$0xff] %vm166, 0.0
        %vm169 = vcmask 21504
        %170 = vst.msk [vmem:[#allocation2 + $0x10] sm:$0x3f] %vm169, 0.0
        %vm171 = vcmask 179352
        %172 = vst.msk [vmem:[#allocation2] sm:$0xff] %vm171, 0.0
        %173 = vst.msk [vmem:[#allocation2 + $0x8] sm:$0xff] %vm171, 0.0
        %vm174 = vcmask 177304
        %175 = vst.msk [vmem:[#allocation2 + $0x10] sm:$0x3f] %vm174, 0.0
        %v176 = vld [vmem:[%s144] sm:$0xff]
        %v177 = vld [vmem:[%s144 + $0x8] sm:$0xff]
        %180 = vrot.lane.b32.xlu0 %v176, 3
        %v181 = vpop.permute.xlu0 %180
        %182 = vrot.lane.b32.xlu0 %v177, 3
        %v183 = vpop.permute.xlu0 %182
        %vm186 = vcmask 154648
        %187 = vst.msk [vmem:[#allocation2 + $0x3] sm:$0xff] %vm186, %v181
        %188 = vst.msk [vmem:[#allocation2 + $0xb] sm:$0xff] %vm186, %v183
        %s189 = smul.u32 %s33, 128
        %s190 = sld [smem:[#allocation4 + %s189]]
        %s191 = sadd.s32 %s189, 1
        %s192 = sld [smem:[#allocation4 + %s191]]
        %s193 = sadd.s32 %s189, 2
        %s194 = sld [smem:[#allocation4 + %s193]]
        %s195 = sadd.s32 %s189, 3
        %s196 = sld [smem:[#allocation4 + %s195]]
        %s197 = sadd.s32 %s189, 4
        %s198 = sld [smem:[#allocation4 + %s197]]
        %s199 = sadd.s32 %s189, 5
        %s200 = sld [smem:[#allocation4 + %s199]]
        %s201 = sadd.s32 %s189, 6
        %s202 = sld [smem:[#allocation4 + %s201]]
        %s203 = sadd.s32 %s189, 7
        %s204 = sld [smem:[#allocation4 + %s203]]
        %s205 = sadd.s32 %s189, 8
        %s206 = sld [smem:[#allocation4 + %s205]]
        %s207 = sadd.s32 %s189, 9
        %s208 = sld [smem:[#allocation4 + %s207]]
        %s209 = sadd.s32 %s189, 10
        %s210 = sld [smem:[#allocation4 + %s209]]
        %s211 = sadd.s32 %s189, 11
        %s212 = sld [smem:[#allocation4 + %s211]]
        %s213 = sadd.s32 %s189, 12
        %s214 = sld [smem:[#allocation4 + %s213]]
        %s215 = sadd.s32 %s189, 13
        %s216 = sld [smem:[#allocation4 + %s215]]
        %s217 = sadd.s32 %s189, 14
        %s218 = sld [smem:[#allocation4 + %s217]]
        %s219 = sadd.s32 %s189, 15
        %s220 = sld [smem:[#allocation4 + %s219]]
        %s221 = sadd.s32 %s189, 16
        %s222 = sld [smem:[#allocation4 + %s221]]
        %s223 = sadd.s32 %s189, 17
        %s224 = sld [smem:[#allocation4 + %s223]]
        %s225 = sadd.s32 %s189, 18
        %s226 = sld [smem:[#allocation4 + %s225]]
        %s227 = sadd.s32 %s189, 19
        %s228 = sld [smem:[#allocation4 + %s227]]
        %s229 = sadd.s32 %s189, 20
        %s230 = sld [smem:[#allocation4 + %s229]]
        %s231 = sadd.s32 %s189, 21
        %s232 = sld [smem:[#allocation4 + %s231]]
        %s233 = sadd.s32 %s189, 22
        %s234 = sld [smem:[#allocation4 + %s233]]
        %s235 = sadd.s32 %s189, 23
        %s236 = sld [smem:[#allocation4 + %s235]]
        %s237 = sadd.s32 %s189, 24
        %s238 = sld [smem:[#allocation4 + %s237]]
        %s239 = sadd.s32 %s189, 25
        %s240 = sld [smem:[#allocation4 + %s239]]
        %s241 = sadd.s32 %s189, 26
        %s242 = sld [smem:[#allocation4 + %s241]]
        %s243 = sadd.s32 %s189, 27
        %s244 = sld [smem:[#allocation4 + %s243]]
        %s245 = sadd.s32 %s189, 28
        %s246 = sld [smem:[#allocation4 + %s245]]
        %s247 = sadd.s32 %s189, 29
        %s248 = sld [smem:[#allocation4 + %s247]]
        %s249 = sadd.s32 %s189, 30
        %s250 = sld [smem:[#allocation4 + %s249]]
        %s251 = sadd.s32 %s189, 31
        %s252 = sld [smem:[#allocation4 + %s251]]
        %s253 = sadd.s32 %s189, 32
        %s254 = sld [smem:[#allocation4 + %s253]]
        %s255 = sadd.s32 %s189, 33
        %s256 = sld [smem:[#allocation4 + %s255]]
        %s257 = sadd.s32 %s189, 34
        %s258 = sld [smem:[#allocation4 + %s257]]
        %s259 = sadd.s32 %s189, 35
        %s260 = sld [smem:[#allocation4 + %s259]]
        %s261 = sadd.s32 %s189, 36
        %s262 = sld [smem:[#allocation4 + %s261]]
        %s263 = sadd.s32 %s189, 37
        %s264 = sld [smem:[#allocation4 + %s263]]
        %s265 = sadd.s32 %s189, 38
        %s266 = sld [smem:[#allocation4 + %s265]]
        %s267 = sadd.s32 %s189, 39
        %s268 = sld [smem:[#allocation4 + %s267]]
        %s269 = sadd.s32 %s189, 40
        %s270 = sld [smem:[#allocation4 + %s269]]
        %s271 = sadd.s32 %s189, 41
        %s272 = sld [smem:[#allocation4 + %s271]]
        %s273 = sadd.s32 %s189, 42
        %s274 = sld [smem:[#allocation4 + %s273]]
        %s275 = sadd.s32 %s189, 43
        %s276 = sld [smem:[#allocation4 + %s275]]
        %s277 = sadd.s32 %s189, 44
        %s278 = sld [smem:[#allocation4 + %s277]]
        %s279 = sadd.s32 %s189, 45
        %s280 = sld [smem:[#allocation4 + %s279]]
        %s281 = sadd.s32 %s189, 46
        %s282 = sld [smem:[#allocation4 + %s281]]
        %s283 = sadd.s32 %s189, 47
        %s284 = sld [smem:[#allocation4 + %s283]]
        %s285 = sadd.s32 %s189, 48
        %s286 = sld [smem:[#allocation4 + %s285]]
        %s287 = sld [smem:[#allocation5 + %s33]]
        %v288 = vstv %s287
        %v289 = vld [vmem:[#allocation2] sm:$0xff]
        %v290 = vstv %s190
        %v291 = vmul.f32 %v290, %v289
        %v292 = vadd.f32 %v288, %v291
        %v293 = vstv %s192
        %v294 = vmul.f32 %v293, %v289
        %296 = vrot.lane.b32.xlu0 %v294, 127
        %v297 = vpop.permute.xlu0 %296
        %v299 = vadd.f32 %v292, %v297
        %v300 = vstv %s194
        %v301 = vmul.f32 %v300, %v289
        %303 = vrot.lane.b32.xlu0 %v301, 126
        %v304 = vpop.permute.xlu0 %303
        %v306 = vadd.f32 %v299, %v304
        %v307 = vstv %s196
        %v308 = vmul.f32 %v307, %v289
        %310 = vrot.lane.b32.xlu0 %v308, 125
        %v311 = vpop.permute.xlu0 %310
        %v313 = vadd.f32 %v306, %v311
        %v314 = vstv %s198
        %v315 = vmul.f32 %v314, %v289
        %317 = vrot.lane.b32.xlu0 %v315, 124
        %v318 = vpop.permute.xlu0 %317
        %v320 = vadd.f32 %v313, %v318
        %v321 = vstv %s200
        %v322 = vmul.f32 %v321, %v289
        %324 = vrot.lane.b32.xlu0 %v322, 123
        %v325 = vpop.permute.xlu0 %324
        %v327 = vadd.f32 %v320, %v325
        %v328 = vstv %s202
        %v329 = vmul.f32 %v328, %v289
        %331 = vrot.lane.b32.xlu0 %v329, 122
        %v332 = vpop.permute.xlu0 %331
        %v334 = vadd.f32 %v327, %v332
        %v335 = vld [vmem:[#allocation2 + $0x1] sm:$0xff]
        %v336 = vstv %s204
        %v337 = vmul.f32 %v336, %v335
        %v338 = vadd.f32 %v334, %v337
        %v339 = vstv %s206
        %v340 = vmul.f32 %v339, %v335
        %342 = vrot.lane.b32.xlu0 %v340, 127
        %v343 = vpop.permute.xlu0 %342
        %v345 = vadd.f32 %v338, %v343
        %v346 = vstv %s208
        %v347 = vmul.f32 %v346, %v335
        %349 = vrot.lane.b32.xlu0 %v347, 126
        %v350 = vpop.permute.xlu0 %349
        %v352 = vadd.f32 %v345, %v350
        %v353 = vstv %s210
        %v354 = vmul.f32 %v353, %v335
        %356 = vrot.lane.b32.xlu0 %v354, 125
        %v357 = vpop.permute.xlu0 %356
        %v359 = vadd.f32 %v352, %v357
        %v360 = vstv %s212
        %v361 = vmul.f32 %v360, %v335
        %363 = vrot.lane.b32.xlu0 %v361, 124
        %v364 = vpop.permute.xlu0 %363
        %v366 = vadd.f32 %v359, %v364
        %v367 = vstv %s214
        %v368 = vmul.f32 %v367, %v335
        %370 = vrot.lane.b32.xlu0 %v368, 123
        %v371 = vpop.permute.xlu0 %370
        %v373 = vadd.f32 %v366, %v371
        %v374 = vstv %s216
        %v375 = vmul.f32 %v374, %v335
        %377 = vrot.lane.b32.xlu0 %v375, 122
        %v378 = vpop.permute.xlu0 %377
        %v380 = vadd.f32 %v373, %v378
        %v381 = vld [vmem:[#allocation2 + $0x2] sm:$0xff]
        %v382 = vstv %s218
        %v383 = vmul.f32 %v382, %v381
        %v384 = vadd.f32 %v380, %v383
        %v385 = vstv %s220
        %v386 = vmul.f32 %v385, %v381
        %388 = vrot.lane.b32.xlu0 %v386, 127
        %v389 = vpop.permute.xlu0 %388
        %v391 = vadd.f32 %v384, %v389
        %v392 = vstv %s222
        %v393 = vmul.f32 %v392, %v381
        %395 = vrot.lane.b32.xlu0 %v393, 126
        %v396 = vpop.permute.xlu0 %395
        %v398 = vadd.f32 %v391, %v396
        %v399 = vstv %s224
        %v400 = vmul.f32 %v399, %v381
        %402 = vrot.lane.b32.xlu0 %v400, 125
        %v403 = vpop.permute.xlu0 %402
        %v405 = vadd.f32 %v398, %v403
        %v406 = vstv %s226
        %v407 = vmul.f32 %v406, %v381
        %409 = vrot.lane.b32.xlu0 %v407, 124
        %v410 = vpop.permute.xlu0 %409
        %v412 = vadd.f32 %v405, %v410
        %v413 = vstv %s228
        %v414 = vmul.f32 %v413, %v381
        %416 = vrot.lane.b32.xlu0 %v414, 123
        %v417 = vpop.permute.xlu0 %416
        %v419 = vadd.f32 %v412, %v417
        %v420 = vstv %s230
        %v421 = vmul.f32 %v420, %v381
        %423 = vrot.lane.b32.xlu0 %v421, 122
        %v424 = vpop.permute.xlu0 %423
        %v426 = vadd.f32 %v419, %v424
        %v427 = vld [vmem:[#allocation2 + $0x3] sm:$0xff]
        %v428 = vstv %s232
        %v429 = vmul.f32 %v428, %v427
        %v430 = vadd.f32 %v426, %v429
        %v431 = vstv %s234
        %v432 = vmul.f32 %v431, %v427
        %434 = vrot.lane.b32.xlu0 %v432, 127
        %v435 = vpop.permute.xlu0 %434
        %v437 = vadd.f32 %v430, %v435
        %v438 = vstv %s236
        %v439 = vmul.f32 %v438, %v427
        %441 = vrot.lane.b32.xlu0 %v439, 126
        %v442 = vpop.permute.xlu0 %441
        %v444 = vadd.f32 %v437, %v442
        %v445 = vstv %s238
        %v446 = vmul.f32 %v445, %v427
        %448 = vrot.lane.b32.xlu0 %v446, 125
        %v449 = vpop.permute.xlu0 %448
        %v451 = vadd.f32 %v444, %v449
        %v452 = vstv %s240
        %v453 = vmul.f32 %v452, %v427
        %455 = vrot.lane.b32.xlu0 %v453, 124
        %v456 = vpop.permute.xlu0 %455
        %v458 = vadd.f32 %v451, %v456
        %v459 = vstv %s242
        %v460 = vmul.f32 %v459, %v427
        %462 = vrot.lane.b32.xlu0 %v460, 123
        %v463 = vpop.permute.xlu0 %462
        %v465 = vadd.f32 %v458, %v463
        %v466 = vstv %s244
        %v467 = vmul.f32 %v466, %v427
        %469 = vrot.lane.b32.xlu0 %v467, 122
        %v470 = vpop.permute.xlu0 %469
        %v472 = vadd.f32 %v465, %v470
        %v473 = vld [vmem:[#allocation2 + $0x4] sm:$0xff]
        %v474 = vstv %s246
        %v475 = vmul.f32 %v474, %v473
        %v476 = vadd.f32 %v472, %v475
        %v477 = vstv %s248
        %v478 = vmul.f32 %v477, %v473
        %480 = vrot.lane.b32.xlu0 %v478, 127
        %v481 = vpop.permute.xlu0 %480
        %v483 = vadd.f32 %v476, %v481
        %v484 = vstv %s250
        %v485 = vmul.f32 %v484, %v473
        %487 = vrot.lane.b32.xlu0 %v485, 126
        %v488 = vpop.permute.xlu0 %487
        %v490 = vadd.f32 %v483, %v488
        %v491 = vstv %s252
        %v492 = vmul.f32 %v491, %v473
        %494 = vrot.lane.b32.xlu0 %v492, 125
        %v495 = vpop.permute.xlu0 %494
        %v497 = vadd.f32 %v490, %v495
        %v498 = vstv %s254
        %v499 = vmul.f32 %v498, %v473
        %501 = vrot.lane.b32.xlu0 %v499, 124
        %v502 = vpop.permute.xlu0 %501
        %v504 = vadd.f32 %v497, %v502
        %v505 = vstv %s256
        %v506 = vmul.f32 %v505, %v473
        %508 = vrot.lane.b32.xlu0 %v506, 123
        %v509 = vpop.permute.xlu0 %508
        %v511 = vadd.f32 %v504, %v509
        %v512 = vstv %s258
        %v513 = vmul.f32 %v512, %v473
        %515 = vrot.lane.b32.xlu0 %v513, 122
        %v516 = vpop.permute.xlu0 %515
        %v518 = vadd.f32 %v511, %v516
        %v519 = vld [vmem:[#allocation2 + $0x5] sm:$0xff]
        %v520 = vstv %s260
        %v521 = vmul.f32 %v520, %v519
        %v522 = vadd.f32 %v518, %v521
        %v523 = vstv %s262
        %v524 = vmul.f32 %v523, %v519
        %526 = vrot.lane.b32.xlu0 %v524, 127
        %v527 = vpop.permute.xlu0 %526
        %v529 = vadd.f32 %v522, %v527
        %v530 = vstv %s264
        %v531 = vmul.f32 %v530, %v519
        %533 = vrot.lane.b32.xlu0 %v531, 126
        %v534 = vpop.permute.xlu0 %533
        %v536 = vadd.f32 %v529, %v534
        %v537 = vstv %s266
        %v538 = vmul.f32 %v537, %v519
        %540 = vrot.lane.b32.xlu0 %v538, 125
        %v541 = vpop.permute.xlu0 %540
        %v543 = vadd.f32 %v536, %v541
        %v544 = vstv %s268
        %v545 = vmul.f32 %v544, %v519
        %547 = vrot.lane.b32.xlu0 %v545, 124
        %v548 = vpop.permute.xlu0 %547
        %v550 = vadd.f32 %v543, %v548
        %v551 = vstv %s270
        %v552 = vmul.f32 %v551, %v519
        %554 = vrot.lane.b32.xlu0 %v552, 123
        %v555 = vpop.permute.xlu0 %554
        %v557 = vadd.f32 %v550, %v555
        %v558 = vstv %s272
        %v559 = vmul.f32 %v558, %v519
        %561 = vrot.lane.b32.xlu0 %v559, 122
        %v562 = vpop.permute.xlu0 %561
        %v564 = vadd.f32 %v557, %v562
        %v565 = vld [vmem:[#allocation2 + $0x6] sm:$0xff]
        %v566 = vstv %s274
        %v567 = vmul.f32 %v566, %v565
        %v568 = vadd.f32 %v564, %v567
        %v569 = vstv %s276
        %v570 = vmul.f32 %v569, %v565
        %572 = vrot.lane.b32.xlu0 %v570, 127
        %v573 = vpop.permute.xlu0 %572
        %v575 = vadd.f32 %v568, %v573
        %v576 = vstv %s278
        %v577 = vmul.f32 %v576, %v565
        %579 = vrot.lane.b32.xlu0 %v577, 126
        %v580 = vpop.permute.xlu0 %579
        %v582 = vadd.f32 %v575, %v580
        %v583 = vstv %s280
        %v584 = vmul.f32 %v583, %v565
        %586 = vrot.lane.b32.xlu0 %v584, 125
        %v587 = vpop.permute.xlu0 %586
        %v589 = vadd.f32 %v582, %v587
        %v590 = vstv %s282
        %v591 = vmul.f32 %v590, %v565
        %593 = vrot.lane.b32.xlu0 %v591, 124
        %v594 = vpop.permute.xlu0 %593
        %v596 = vadd.f32 %v589, %v594
        %v597 = vstv %s284
        %v598 = vmul.f32 %v597, %v565
        %600 = vrot.lane.b32.xlu0 %v598, 123
        %v601 = vpop.permute.xlu0 %600
        %v603 = vadd.f32 %v596, %v601
        %v604 = vstv %s286
        %v605 = vmul.f32 %v604, %v565
        %607 = vrot.lane.b32.xlu0 %v605, 122
        %v608 = vpop.permute.xlu0 %607
        %v610 = vadd.f32 %v603, %v608
        %v611 = vsub.f32 0.0, %v610
        %v612 = vmul.f32 %v611, 1.442695
        %v613 = vpow.pop %v612
        %v614 = vadd.f32 %v613, 1.0
        %v615 = vrcp.pop %v614
        %v616 = vld [vmem:[%s144] sm:$0xff]
        %v617 = vmul.f32 %v616, %v615
        %vm618 = vcmask 130048
        %619 = vst.msk [vmem:[%s162] sm:$0xff] %vm618, %v617
        %v620 = vld [vmem:[#allocation2 + $0x8] sm:$0xff]
        %v621 = vmul.f32 %v290, %v620
        %v622 = vadd.f32 %v288, %v621
        %v623 = vmul.f32 %v293, %v620
        %625 = vrot.lane.b32.xlu0 %v623, 127
        %v626 = vpop.permute.xlu0 %625
        %v628 = vadd.f32 %v622, %v626
        %v629 = vmul.f32 %v300, %v620
        %631 = vrot.lane.b32.xlu0 %v629, 126
        %v632 = vpop.permute.xlu0 %631
        %v634 = vadd.f32 %v628, %v632
        %v635 = vmul.f32 %v307, %v620
        %637 = vrot.lane.b32.xlu0 %v635, 125
        %v638 = vpop.permute.xlu0 %637
        %v640 = vadd.f32 %v634, %v638
        %v641 = vmul.f32 %v314, %v620
        %643 = vrot.lane.b32.xlu0 %v641, 124
        %v644 = vpop.permute.xlu0 %643
        %v646 = vadd.f32 %v640, %v644
        %v647 = vmul.f32 %v321, %v620
        %649 = vrot.lane.b32.xlu0 %v647, 123
        %v650 = vpop.permute.xlu0 %649
        %v652 = vadd.f32 %v646, %v650
        %v653 = vmul.f32 %v328, %v620
        %655 = vrot.lane.b32.xlu0 %v653, 122
        %v656 = vpop.permute.xlu0 %655
        %v658 = vadd.f32 %v652, %v656
        %v659 = vld [vmem:[#allocation2 + $0x9] sm:$0xff]
        %v660 = vmul.f32 %v336, %v659
        %v661 = vadd.f32 %v658, %v660
        %v662 = vmul.f32 %v339, %v659
        %664 = vrot.lane.b32.xlu0 %v662, 127
        %v665 = vpop.permute.xlu0 %664
        %v667 = vadd.f32 %v661, %v665
        %v668 = vmul.f32 %v346, %v659
        %670 = vrot.lane.b32.xlu0 %v668, 126
        %v671 = vpop.permute.xlu0 %670
        %v673 = vadd.f32 %v667, %v671
        %v674 = vmul.f32 %v353, %v659
        %676 = vrot.lane.b32.xlu0 %v674, 125
        %v677 = vpop.permute.xlu0 %676
        %v679 = vadd.f32 %v673, %v677
        %v680 = vmul.f32 %v360, %v659
        %682 = vrot.lane.b32.xlu0 %v680, 124
        %v683 = vpop.permute.xlu0 %682
        %v685 = vadd.f32 %v679, %v683
        %v686 = vmul.f32 %v367, %v659
        %688 = vrot.lane.b32.xlu0 %v686, 123
        %v689 = vpop.permute.xlu0 %688
        %v691 = vadd.f32 %v685, %v689
        %v692 = vmul.f32 %v374, %v659
        %694 = vrot.lane.b32.xlu0 %v692, 122
        %v695 = vpop.permute.xlu0 %694
        %v697 = vadd.f32 %v691, %v695
        %v698 = vld [vmem:[#allocation2 + $0xa] sm:$0xff]
        %v699 = vmul.f32 %v382, %v698
        %v700 = vadd.f32 %v697, %v699
        %v701 = vmul.f32 %v385, %v698
        %703 = vrot.lane.b32.xlu0 %v701, 127
        %v704 = vpop.permute.xlu0 %703
        %v706 = vadd.f32 %v700, %v704
        %v707 = vmul.f32 %v392, %v698
        %709 = vrot.lane.b32.xlu0 %v707, 126
        %v710 = vpop.permute.xlu0 %709
        %v712 = vadd.f32 %v706, %v710
        %v713 = vmul.f32 %v399, %v698
        %715 = vrot.lane.b32.xlu0 %v713, 125
        %v716 = vpop.permute.xlu0 %715
        %v718 = vadd.f32 %v712, %v716
        %v719 = vmul.f32 %v406, %v698
        %721 = vrot.lane.b32.xlu0 %v719, 124
        %v722 = vpop.permute.xlu0 %721
        %v724 = vadd.f32 %v718, %v722
        %v725 = vmul.f32 %v413, %v698
        %727 = vrot.lane.b32.xlu0 %v725, 123
        %v728 = vpop.permute.xlu0 %727
        %v730 = vadd.f32 %v724, %v728
        %v731 = vmul.f32 %v420, %v698
        %733 = vrot.lane.b32.xlu0 %v731, 122
        %v734 = vpop.permute.xlu0 %733
        %v736 = vadd.f32 %v730, %v734
        %v737 = vld [vmem:[#allocation2 + $0xb] sm:$0xff]
        %v738 = vmul.f32 %v428, %v737
        %v739 = vadd.f32 %v736, %v738
        %v740 = vmul.f32 %v431, %v737
        %742 = vrot.lane.b32.xlu0 %v740, 127
        %v743 = vpop.permute.xlu0 %742
        %v745 = vadd.f32 %v739, %v743
        %v746 = vmul.f32 %v438, %v737
        %748 = vrot.lane.b32.xlu0 %v746, 126
        %v749 = vpop.permute.xlu0 %748
        %v751 = vadd.f32 %v745, %v749
        %v752 = vmul.f32 %v445, %v737
        %754 = vrot.lane.b32.xlu0 %v752, 125
        %v755 = vpop.permute.xlu0 %754
        %v757 = vadd.f32 %v751, %v755
        %v758 = vmul.f32 %v452, %v737
        %760 = vrot.lane.b32.xlu0 %v758, 124
        %v761 = vpop.permute.xlu0 %760
        %v763 = vadd.f32 %v757, %v761
        %v764 = vmul.f32 %v459, %v737
        %766 = vrot.lane.b32.xlu0 %v764, 123
        %v767 = vpop.permute.xlu0 %766
        %v769 = vadd.f32 %v763, %v767
        %v770 = vmul.f32 %v466, %v737
        %772 = vrot.lane.b32.xlu0 %v770, 122
        %v773 = vpop.permute.xlu0 %772
        %v775 = vadd.f32 %v769, %v773
        %v776 = vld [vmem:[#allocation2 + $0xc] sm:$0xff]
        %v777 = vmul.f32 %v474, %v776
        %v778 = vadd.f32 %v775, %v777
        %v779 = vmul.f32 %v477, %v776
        %781 = vrot.lane.b32.xlu0 %v779, 127
        %v782 = vpop.permute.xlu0 %781
        %v784 = vadd.f32 %v778, %v782
        %v785 = vmul.f32 %v484, %v776
        %787 = vrot.lane.b32.xlu0 %v785, 126
        %v788 = vpop.permute.xlu0 %787
        %v790 = vadd.f32 %v784, %v788
        %v791 = vmul.f32 %v491, %v776
        %793 = vrot.lane.b32.xlu0 %v791, 125
        %v794 = vpop.permute.xlu0 %793
        %v796 = vadd.f32 %v790, %v794
        %v797 = vmul.f32 %v498, %v776
        %799 = vrot.lane.b32.xlu0 %v797, 124
        %v800 = vpop.permute.xlu0 %799
        %v802 = vadd.f32 %v796, %v800
        %v803 = vmul.f32 %v505, %v776
        %805 = vrot.lane.b32.xlu0 %v803, 123
        %v806 = vpop.permute.xlu0 %805
        %v808 = vadd.f32 %v802, %v806
        %v809 = vmul.f32 %v512, %v776
        %811 = vrot.lane.b32.xlu0 %v809, 122
        %v812 = vpop.permute.xlu0 %811
        %v814 = vadd.f32 %v808, %v812
        %v815 = vld [vmem:[#allocation2 + $0xd] sm:$0xff]
        %v816 = vmul.f32 %v520, %v815
        %v817 = vadd.f32 %v814, %v816
        %v818 = vmul.f32 %v523, %v815
        %820 = vrot.lane.b32.xlu0 %v818, 127
        %v821 = vpop.permute.xlu0 %820
        %v823 = vadd.f32 %v817, %v821
        %v824 = vmul.f32 %v530, %v815
        %826 = vrot.lane.b32.xlu0 %v824, 126
        %v827 = vpop.permute.xlu0 %826
        %v829 = vadd.f32 %v823, %v827
        %v830 = vmul.f32 %v537, %v815
        %832 = vrot.lane.b32.xlu0 %v830, 125
        %v833 = vpop.permute.xlu0 %832
        %v835 = vadd.f32 %v829, %v833
        %v836 = vmul.f32 %v544, %v815
        %838 = vrot.lane.b32.xlu0 %v836, 124
        %v839 = vpop.permute.xlu0 %838
        %v841 = vadd.f32 %v835, %v839
        %v842 = vmul.f32 %v551, %v815
        %844 = vrot.lane.b32.xlu0 %v842, 123
        %v845 = vpop.permute.xlu0 %844
        %v847 = vadd.f32 %v841, %v845
        %v848 = vmul.f32 %v558, %v815
        %850 = vrot.lane.b32.xlu0 %v848, 122
        %v851 = vpop.permute.xlu0 %850
        %v853 = vadd.f32 %v847, %v851
        %v854 = vld [vmem:[#allocation2 + $0xe] sm:$0xff]
        %v855 = vmul.f32 %v566, %v854
        %v856 = vadd.f32 %v853, %v855
        %v857 = vmul.f32 %v569, %v854
        %859 = vrot.lane.b32.xlu0 %v857, 127
        %v860 = vpop.permute.xlu0 %859
        %v862 = vadd.f32 %v856, %v860
        %v863 = vmul.f32 %v576, %v854
        %865 = vrot.lane.b32.xlu0 %v863, 126
        %v866 = vpop.permute.xlu0 %865
        %v868 = vadd.f32 %v862, %v866
        %v869 = vmul.f32 %v583, %v854
        %871 = vrot.lane.b32.xlu0 %v869, 125
        %v872 = vpop.permute.xlu0 %871
        %v874 = vadd.f32 %v868, %v872
        %v875 = vmul.f32 %v590, %v854
        %877 = vrot.lane.b32.xlu0 %v875, 124
        %v878 = vpop.permute.xlu0 %877
        %v880 = vadd.f32 %v874, %v878
        %v881 = vmul.f32 %v597, %v854
        %883 = vrot.lane.b32.xlu0 %v881, 123
        %v884 = vpop.permute.xlu0 %883
        %v886 = vadd.f32 %v880, %v884
        %v887 = vmul.f32 %v604, %v854
        %889 = vrot.lane.b32.xlu0 %v887, 122
        %v890 = vpop.permute.xlu0 %889
        %v892 = vadd.f32 %v886, %v890
        %v893 = vsub.f32 0.0, %v892
        %v894 = vmul.f32 %v893, 1.442695
        %v895 = vpow.pop %v894
        %v896 = vadd.f32 %v895, 1.0
        %v897 = vrcp.pop %v896
        %v898 = vld [vmem:[%s144 + $0x8] sm:$0xff]
        %v899 = vmul.f32 %v898, %v897
        %900 = vst.msk [vmem:[%s162 + $0x8] sm:$0xff] %vm618, %v899
        %s901 = sand.u32 %s78, 1
        %s902 = scalar_lea.sflag [#allocation8], %s901
        %s903 = sand.u32 %s78, 1
        %s904 = smul.addr %s903, 16
        %s905 = scalar_lea.vmem [#allocation9], %s904
        // Predicated region
        $region29: #{tpu_custom_call.1} parent=23 // pred_check
          %p906 = pneg %p88
        $region30: #{tpu_custom_call.1} parent=23 // pred_check_branch
          %908 = sbr.rel (%p906) target = $region32
        $region31: #{tpu_custom_call.1} parent=23 // pred_region
          %s910 = ssub.s32 256, 256
          %911 = vsyncadd %s902, %s910
          %s912 = smul.addr %s33, 2
          %s913 = smul.addr %s32, 8
          %s914 = sadd.s32 %s912, %s913
          %s915 = smul.addr %s914, 128
          %s916 = scalar_lea.hbm %s3, %s915
          %s917 = sshll.u32 %s905, 4
          %s918 = int_to_ptr.vmem [resolvable:$true] %s917
          %923 = dma.vmem_to_hbm [thread:$0]  %s918, 256, %s916, %s902, 128, 128, 8
        $region32: #{tpu_custom_call.1} parent=23 // pred_fallthru
          _
      $region24: #{tpu_custom_call.1} parent=5 // pred_fallthru
        _
      %p924 = scmp.le.s32.totalorder 2, %s23
      // Predicated region
      $region33: #{tpu_custom_call.1} parent=5 // pred_check
        %p925 = pneg %p924
      $region34: #{tpu_custom_call.1} parent=5 // pred_check_branch
        %927 = sbr.rel (%p925) target = $region36
      $region35: #{tpu_custom_call.1} parent=5 // pred_region
        %s928 = ssub.s32 %s23, 2
        // Predicated region
        $region37: #{tpu_custom_call.1} parent=35 // pred_check
          %p929 = pneg %p94
        $region38: #{tpu_custom_call.1} parent=35 // pred_check_branch
          %931 = sbr.rel (%p929) target = $region40
        $region39: #{tpu_custom_call.1} parent=35 // pred_region
          %s932 = sand.u32 %s79, 1
          %s933 = scalar_lea.sflag [#allocation8], %s932
          %s934 = sand.u32 %s79, 1
          %s935 = smul.addr %s934, 16
          %s936 = scalar_lea.vmem [#allocation9], %s935
          %937 = dma.done %s933, 256
        $region40: #{tpu_custom_call.1} parent=35 // pred_fallthru
          _
      $region36: #{tpu_custom_call.1} parent=5 // pred_fallthru
        _
    $region6: #{tpu_custom_call.1} parent=1 // loop_footer
      %s27 = sadd.s32 1, %s23
    $region7: #{tpu_custom_call.1} parent=1 // loop_footer_branch
      %22 = sbr.rel target = $region3
    $region8: #{tpu_custom_call.1} parent=1 // loop_exit
      _
    %938 = vsyncpa [#allocation7], 1
    %s939 = scalar_lea.sflag [#allocation7], 1
    %940 = vsyncpa %s939, 1
    %941 = vsyncpa [#allocation8], 1
    %s942 = scalar_lea.sflag [#allocation8], 1
    %943 = vsyncpa %s942, 1

</llo_original>
